<compile_context>
chip_gen: v6e
topology: v6e:2x2x1
jax: 0.10.0
libtpu: 0.0.40
codegen_flags: <defaults>
</compile_context>

<pallas_src>
import jax
import jax.numpy as jnp
from jax.experimental import pallas as pl
from jax.experimental.pallas import tpu as pltpu


def _round_up(n, m):
    return ((n + m - 1) // m) * m


D = 32                        # node_feat_dim
MSG_H1, MSG_H2 = 64, 64       # message_net_hiddens
UPD_H1, UPD_H2 = 64, 32       # update_net_hiddens
ATT_EXT = _round_up(D + 1, 8)  # x1^T rows + ones row (denominator fold), padded

TILE_NODES = 512
TILE_EDGES = 512
TILE_ATT = 512
VMEM_LIMIT = 32 * 1024 * 1024  # safe scoped default on v5e/v6e/v7x

NEG_BIG = -1e30               # finite mask value (never produces inf - inf)


def _pick_tile(n, default_tile, align):
    """(row_tile, padded_rows): tile multiple of `align`, padded multiple of tile."""
    r = _round_up(max(n, align), align)
    if r <= default_tile:
        return r, r
    return default_tile, _round_up(n, default_tile)


# ----------------------------- Pallas kernels ------------------------------

def edge_mlp_kernel(xe_ref, w1_ref, b1_ref, w2_ref, b2_ref, msg_ref):
    """Grid = (edge_tiles,). message_net on cat(x_src, x_tgt); bf16 output."""
    h = jnp.dot(xe_ref[...], w1_ref[...],
                preferred_element_type=jnp.float32) + b1_ref[...]
    h = jnp.maximum(h, 0.0)
    msg = jnp.dot(h.astype(jnp.bfloat16), w2_ref[...],
                  preferred_element_type=jnp.float32) + b2_ref[...]
    msg_ref[...] = msg.astype(jnp.bfloat16)


def scatter_update_kernel(tgt_ref, msg_ref, attx_ref, x_ref,
                          wu1_ref, bu1_ref, wu2_ref, bu2_ref, wu3_ref, bu3_ref,
                          out_ref, acc_ref):
    """Grid = (node_tiles, edge_tiles); edge axis is the reduction axis.

    Scatter-add of the (precomputed) messages via an in-kernel one-hot MXU
    matmul; the residual node update runs in the epilogue on the resident
    accumulator (no HBM round trip for the aggregated messages)."""
    ni = pl.program_id(0)
    ei = pl.program_id(1)

    @pl.when(ei == 0)
    def _():
        acc_ref[...] = jnp.zeros_like(acc_ref)

    tile_n = acc_ref.shape[0]
    tile_e = msg_ref.shape[0]
    # one-hot block: rows = local node ids, cols = edges of this tile.
    local_tgt = tgt_ref[...] - ni * tile_n                        # (1, tile_e)
    onehot = (jax.lax.broadcasted_iota(jnp.int32, (tile_n, tile_e), 0)
              == local_tgt).astype(jnp.bfloat16)
    acc_ref[...] += jnp.dot(onehot, msg_ref[...],
                            preferred_element_type=jnp.float32)

    @pl.when(ei == pl.num_programs(1) - 1)
    def _():
        # update_net input: [messages(64) | att(32) | x(32)]  -> single K=128 matmul
        upd_in = jnp.concatenate(
            [acc_ref[...].astype(jnp.bfloat16), attx_ref[...]], axis=1)
        h = jnp.dot(upd_in, wu1_ref[...],
                    preferred_element_type=jnp.float32) + bu1_ref[...]
        h = jnp.maximum(h, 0.0)
        h = jnp.dot(h.astype(jnp.bfloat16), wu2_ref[...],
                    preferred_element_type=jnp.float32) + bu2_ref[...]
        h = jnp.maximum(h, 0.0)
        dx = jnp.dot(h.astype(jnp.bfloat16), wu3_ref[...],
                     preferred_element_type=jnp.float32) + bu3_ref[...]
        out_ref[...] = x_ref[...] + dx        # node_update_type == 'residual'


def cross_attention_kernel(x1e_ref, b1_ref, x2t_ref, b2_ref,
                           att1t_ref, att2t_ref, acc2_ref, m2_ref):
    """Grid = (x1_tiles,), feature-major layout (nodes on the lane axis).

    Row (dim=1) softmax is finished per tile with a per-row max; the column
    (dim=0) softmax is accumulated online across tiles with a per-column
    running max vector. The column denominator is folded into the numerator
    matmul through the ones row (row D) of x1e."""
    i = pl.program_id(0)

    @pl.when(i == 0)
    def _():
        acc2_ref[...] = jnp.zeros_like(acc2_ref)
        m2_ref[...] = jnp.full(m2_ref.shape, NEG_BIG, m2_ref.dtype)

    x1e = x1e_ref[...]                         # (ATT_EXT, T): rows 0:D = x1^T, row D = 1
    x1t = x1e[:D, :]                           # (D, T)  f32
    x2t = x2t_ref[...]                         # (D, N2) f32
    x1e_b = x1e.astype(jnp.bfloat16)
    x1t_b = x1t.astype(jnp.bfloat16)
    x2t_b = x2t.astype(jnp.bfloat16)

    # scores s[t, j] = <x1[t], x2[j]>   (contract feature axes; no transposes)
    s = jax.lax.dot_general(x1t_b, x2t_b, (((0,), (0,)), ((), ())),
                            preferred_element_type=jnp.float32)   # (T, N2)
    mask = b1_ref[...] == b2_ref[...]          # (T,1) == (1,N2) -> (T, N2)
    s = jnp.where(mask, s, NEG_BIG)

    # ---- row softmax (dim=1), finished within the tile
    m1 = jnp.max(s, axis=1, keepdims=True)                         # (T, 1)
    e1 = jnp.where(mask, jnp.exp(s - m1), 0.0)
    rs = jnp.sum(e1, axis=1, keepdims=True)
    p1 = e1 * pl.reciprocal(jnp.where(rs > 0.0, rs, 1.0))          # padded rows -> 0
    # att1^T = x1^T - (softmax(s,1) @ x2)^T
    att1t_ref[...] = x1t - jax.lax.dot_general(
        x2t_b, p1.astype(jnp.bfloat16), (((1,), (1,)), ((), ())),
        preferred_element_type=jnp.float32)

    # ---- column softmax (dim=0): online accumulation across x1 tiles
    m2_old = m2_ref[...]                                           # (1, N2)
    m2_new = jnp.maximum(m2_old, jnp.max(s, axis=0, keepdims=True))
    e2 = jnp.where(mask, jnp.exp(s - m2_new), 0.0)                 # (T, N2)
    rescale = jnp.exp(m2_old - m2_new)                             # (1, N2)
    # one matmul gives numerator (rows 0:D) AND denominator (row D, via the
    # ones row of x1e):  acc2[r, j] = sum_t x1e[r, t] * e2[t, j]
    acc2_ref[...] = acc2_ref[...] * rescale + jnp.dot(
        x1e_b, e2.astype(jnp.bfloat16), preferred_element_type=jnp.float32)
    m2_ref[...] = m2_new

    @pl.when(i == pl.num_programs(0) - 1)
    def _():
        l2 = acc2_ref[D:D + 1, :]                                  # (1, N2)
        inv2 = pl.reciprocal(jnp.where(l2 > 0.0, l2, 1.0))         # padded cols -> keep 0
        att2t_ref[...] = x2t - acc2_ref[:D, :] * inv2


# ------------------------------ pallas_call wrappers -------------------------

def _edge_mlp_call(xe, msg_params_bf16, e_pad, tile_e):
    w1, b1, w2, b2 = msg_params_bf16
    return pl.pallas_call(
        edge_mlp_kernel,
        out_shape=jax.ShapeDtypeStruct((e_pad, MSG_H2), jnp.bfloat16),
        grid_spec=pltpu.PrefetchScalarGridSpec(
            num_scalar_prefetch=0,
            grid=(e_pad // tile_e,),
            in_specs=[
                pl.BlockSpec((tile_e, 2 * D), lambda i: (i, 0)),
                pl.BlockSpec(w1.shape, lambda i: (0, 0)),
                pl.BlockSpec(b1.shape, lambda i: (0, 0)),
                pl.BlockSpec(w2.shape, lambda i: (0, 0)),
                pl.BlockSpec(b2.shape, lambda i: (0, 0)),
            ],
            out_specs=pl.BlockSpec((tile_e, MSG_H2), lambda i: (i, 0))),
        compiler_params=pltpu.CompilerParams(
            dimension_semantics=("parallel",),
            vmem_limit_bytes=VMEM_LIMIT),
    )(xe, w1, b1, w2, b2)


def _scatter_update_call(tgt_ids, msg, attx, x_pad, upd_params_bf16,
                         n_pad, e_pad, tile_n, tile_e):
    wu1, bu1, wu2, bu2, wu3, bu3 = upd_params_bf16
    grid = (n_pad // tile_n, e_pad // tile_e)
    return pl.pallas_call(
        scatter_update_kernel,
        out_shape=jax.ShapeDtypeStruct((n_pad, D), jnp.float32),
        grid_spec=pltpu.PrefetchScalarGridSpec(
            num_scalar_prefetch=0,
            grid=grid,
            in_specs=[
                pl.BlockSpec((1, tile_e), lambda ni, ei: (0, ei)),
                pl.BlockSpec((tile_e, MSG_H2), lambda ni, ei: (ei, 0)),
                pl.BlockSpec((tile_n, 2 * D), lambda ni, ei: (ni, 0)),
                pl.BlockSpec((tile_n, D), lambda ni, ei: (ni, 0)),
                pl.BlockSpec(wu1.shape, lambda ni, ei: (0, 0)),
                pl.BlockSpec(bu1.shape, lambda ni, ei: (0, 0)),
                pl.BlockSpec(wu2.shape, lambda ni, ei: (0, 0)),
                pl.BlockSpec(bu2.shape, lambda ni, ei: (0, 0)),
                pl.BlockSpec(wu3.shape, lambda ni, ei: (0, 0)),
                pl.BlockSpec(bu3.shape, lambda ni, ei: (0, 0)),
            ],
            out_specs=pl.BlockSpec((tile_n, D), lambda ni, ei: (ni, 0)),
            scratch_shapes=[pltpu.VMEM((tile_n, MSG_H2), jnp.float32)]),
        compiler_params=pltpu.CompilerParams(
            dimension_semantics=("parallel", "arbitrary"),
            vmem_limit_bytes=VMEM_LIMIT),
    )(tgt_ids, msg, attx, x_pad, wu1, bu1, wu2, bu2, wu3, bu3)


def _cross_attention_call(x1, batch1, x2, batch2):
    n1, d = x1.shape
    n2 = x2.shape[0]
    tile1 = min(TILE_ATT, _round_up(n1, 128))
    n1_pad = _round_up(n1, tile1)
    n2_pad = _round_up(max(n2, 128), 128)

    # x1 extended & transposed: rows 0:D = x1^T, row D = 1 (folded denominator);
    # node axis is the lane axis -> lane-dense attention outputs.
    x1e = jnp.zeros((ATT_EXT, n1_pad), jnp.float32)
    x1e = x1e.at[:d, :n1].set(x1.T)
    x1e = x1e.at[d, :].set(1.0)
    x2t = jnp.zeros((d, n2_pad), jnp.float32).at[:, :n2].set(x2.T)

    # padded rows/cols get batch ids that never match anything (incl. each other)
    b1p = jnp.full((n1_pad, 1), -1, jnp.int32).at[:n1, 0].set(batch1.astype(jnp.int32))
    b2p = jnp.full((1, n2_pad), -2, jnp.int32).at[0, :n2].set(batch2.astype(jnp.int32))

    att1t, att2t = pl.pallas_call(
        cross_attention_kernel,
        out_shape=(jax.ShapeDtypeStruct((d, n1_pad), jnp.float32),
                   jax.ShapeDtypeStruct((d, n2_pad), jnp.float32)),
        grid_spec=pltpu.PrefetchScalarGridSpec(
            num_scalar_prefetch=0,
            grid=(n1_pad // tile1,),
            in_specs=[
                pl.BlockSpec((ATT_EXT, tile1), lambda i: (0, i)),
                pl.BlockSpec((tile1, 1), lambda i: (i, 0)),
                pl.BlockSpec((d, n2_pad), lambda i: (0, 0)),
                pl.BlockSpec((1, n2_pad), lambda i: (0, 0)),
            ],
            out_specs=(pl.BlockSpec((d, tile1), lambda i: (0, i)),
                       pl.BlockSpec((d, n2_pad), lambda i: (0, 0))),
            scratch_shapes=[pltpu.VMEM((ATT_EXT, n2_pad), jnp.float32),
                            pltpu.VMEM((1, n2_pad), jnp.float32)]),
        compiler_params=pltpu.CompilerParams(
            dimension_semantics=("arbitrary",),   # carries column-softmax state
            vmem_limit_bytes=VMEM_LIMIT),
    )(x1e, b1p, x2t, b2p)
    return att1t[:, :n1].T, att2t[:, :n2].T


# ------------------------------- forward pass --------------------------------

def gmn_conv_forward(params, x1, edge_index1, batch1, x2, edge_index2, batch2):
    msg_params, upd_params = params
    mw1, mb1, mw2, mb2 = msg_params
    uw1, ub1, uw2, ub2, uw3, ub3 = upd_params

    n1 = x1.shape[0]
    n2 = x2.shape[0]

    # merge the two graphs: one edge-MLP launch + one scatter/update launch total
    x_all = jnp.concatenate([x1, x2], axis=0)                        # (N, D)
    tgt = jnp.concatenate([edge_index1[0], edge_index2[0] + n1]).astype(jnp.int32)
    src = jnp.concatenate([edge_index1[1], edge_index2[1] + n1]).astype(jnp.int32)
    n = n1 + n2
    e = tgt.shape[0]

    tile_n, n_pad = _pick_tile(n, TILE_NODES, 8)
    tile_e, e_pad = _pick_tile(e, TILE_EDGES, 16)     # 16: bf16 sublane pack

    # ---- edge MLP inputs: cat(x_src, x_tgt) built once in HBM, bf16
    xe = jnp.concatenate([jnp.take(x_all, src, axis=0),
                          jnp.take(x_all, tgt, axis=0)], axis=1)     # (E, 2D)
    xe = jnp.pad(xe, ((0, e_pad - e), (0, 0))).astype(jnp.bfloat16)
    tgt_ids = jnp.pad(tgt, (0, e_pad - e), constant_values=-1).reshape(1, e_pad)

    msg = _edge_mlp_call(
        xe,
        (mw1.astype(jnp.bfloat16), mb1, mw2.astype(jnp.bfloat16), mb2),
        e_pad, tile_e)                                               # (e_pad, 64) bf16

    # ---- masked cross attention between the two graphs
    att1, att2 = _cross_attention_call(x1, batch1, x2, batch2)

    # ---- scatter-add of messages + fused residual node update
    x_pad = jnp.pad(x_all, ((0, n_pad - n), (0, 0)))
    attx = jnp.concatenate(
        [jnp.concatenate([att1, att2], axis=0), x_all], axis=1)      # (N, 2D) = [att | x]
    attx = jnp.pad(attx, ((0, n_pad - n), (0, 0))).astype(jnp.bfloat16)

    upd_bf16 = (uw1.astype(jnp.bfloat16), ub1,
                uw2.astype(jnp.bfloat16), ub2,
                uw3.astype(jnp.bfloat16), ub3)
    new_x = _scatter_update_call(tgt_ids, msg, attx, x_pad, upd_bf16,
                                 n_pad, e_pad, tile_n, tile_e)       # (n_pad, D)
    return new_x[:n1], new_x[n1:n]


# --------------------------- parameters & reference --------------------------

def _linear_init(key, fan_in, fan_out):
    # torch.nn.Linear default init: U(-1/sqrt(fan_in), 1/sqrt(fan_in));
    # stored as (in, out) so y = x @ W + b.
    kw, kb = jax.random.split(key)
    bound = 1.0 / jnp.sqrt(float(fan_in))
    w = jax.random.uniform(kw, (fan_in, fan_out), jnp.float32, -bound, bound)
    b = jax.random.uniform(kb, (1, fan_out), jnp.float32, -bound, bound)
    return w, b


def init_params(key):
    k = jax.random.split(key, 5)
    mw1, mb1 = _linear_init(k[0], 2 * D, MSG_H1)
    mw2, mb2 = _linear_init(k[1], MSG_H1, MSG_H2)
    uw1, ub1 = _linear_init(k[2], 4 * D, UPD_H1)   # rows: [msg(64) | att(32) | x(32)]
    uw2, ub2 = _linear_init(k[3], UPD_H1, UPD_H2)
    uw3, ub3 = _linear_init(k[4], UPD_H2, D)
    return (mw1, mb1, mw2, mb2), (uw1, ub1, uw2, ub2, uw3, ub3)


def _reference(params, x1, edge_index1, batch1, x2, edge_index2, batch2):
    """Pure-JAX f32 GMNConv forward (residual, no layer norm)."""
    (mw1, mb1, mw2, mb2), (uw1, ub1, uw2, ub2, uw3, ub3) = params

    def message_aggr(x, edge_index):
        tgt, src = edge_index[0], edge_index[1]
        mi = jnp.concatenate([x[src], x[tgt]], axis=1)
        h = jax.nn.relu(mi @ mw1 + mb1)
        m = h @ mw2 + mb2
        return jnp.zeros((x.shape[0], m.shape[1]), m.dtype).at[tgt].add(m)

    def cross_attention(xa, ba, xb, bb):
        s = xa @ xb.T
        mask = ba[:, None] == bb[None, :]
        s = jnp.where(mask, s, -jnp.inf)
        wa = jax.nn.softmax(s, axis=1)
        wb = jax.nn.softmax(s, axis=0)
        return xa - wa @ xb, xb - wb.T @ xa

    def node_update(x, m, a):
        u = jnp.concatenate([m, a, x], axis=1)
        h = jax.nn.relu(u @ uw1 + ub1)
        h = jax.nn.relu(h @ uw2 + ub2)
        return x + (h @ uw3 + ub3)

    m1 = message_aggr(x1, edge_index1)
    m2 = message_aggr(x2, edge_index2)
    a1, a2 = cross_attention(x1, batch1, x2, batch2)
    return node_update(x1, m1, a1), node_update(x2, m2, a2)


# ----------------------------------- main -------------------------------------

if __name__ == "__main__":
    key = jax.random.PRNGKey(0)
    kp, kx1, kx2, ke1, ke2 = jax.random.split(key, 5)

    params = init_params(kp)

    # two graphs per side (batched, batch ids 0/1)
    N1, E1 = 10, 20
    N2, E2 = 12, 24
    x1 = jax.random.normal(kx1, (N1, D), jnp.float32)
    x2 = jax.random.normal(kx2, (N2, D), jnp.float32)
    batch1 = jnp.array([0] * 5 + [1] * 5, dtype=jnp.int32)
    batch2 = jnp.array([0] * 6 + [1] * 6, dtype=jnp.int32)
    edge_index1 = jax.random.randint(ke1, (2, E1), 0, N1, dtype=jnp.int32)
    edge_index2 = jax.random.randint(ke2, (2, E2), 0, N2, dtype=jnp.int32)

    fwd = jax.jit(gmn_conv_forward)
    new_x1, new_x2 = fwd(params, x1, edge_index1, batch1, x2, edge_index2, batch2)
    jax.block_until_ready((new_x1, new_x2))

    assert new_x1.shape == (N1, D) and new_x2.shape == (N2, D)
    assert jnp.isfinite(new_x1).all() and jnp.isfinite(new_x2).all()

    # parity vs. f32 reference (kernel uses bf16 MXU operands -> loose tol)
    ref1, ref2 = _reference(params, x1, edge_index1, batch1,
                            x2, edge_index2, batch2)
    err = max(float(jnp.max(jnp.abs(new_x1 - ref1))),
              float(jnp.max(jnp.abs(new_x2 - ref2))))
    assert err < 0.2, f"max abs error vs reference: {err}"

    print("KERNEL_OK")
</pallas_src>

<mosaic_0001>
module attributes {stable_mosaic.version = 11 : i64} {
  func.func @edge_mlp_kernel(%arg0: i32, %arg1: memref<48x64xbf16, #tpu.memory_space<vmem>>, %arg2: memref<64x64xbf16, #tpu.memory_space<vmem>>, %arg3: memref<1x64xf32, #tpu.memory_space<vmem>>, %arg4: memref<64x64xbf16, #tpu.memory_space<vmem>>, %arg5: memref<1x64xf32, #tpu.memory_space<vmem>>, %arg6: memref<48x64xbf16, #tpu.memory_space<vmem>>) attributes {dimension_semantics = [#tpu.dimension_semantics<parallel>], iteration_bounds = array<i64: 1>, scalar_prefetch = 0 : i64, scratch_operands = 0 : i64, tpu.core_type = #tpu.core_type<tc>, window_params = [{transform_indices = @transform_0, window_bounds = array<i64: 48, 64>}, {pipeline_mode = #tpu.pipeline_mode<synchronous>, transform_indices = @transform_1, window_bounds = array<i64: 64, 64>}, {pipeline_mode = #tpu.pipeline_mode<synchronous>, transform_indices = @transform_2, window_bounds = array<i64: 1, 64>}, {pipeline_mode = #tpu.pipeline_mode<synchronous>, transform_indices = @transform_3, window_bounds = array<i64: 64, 64>}, {pipeline_mode = #tpu.pipeline_mode<synchronous>, transform_indices = @transform_4, window_bounds = array<i64: 1, 64>}, {transform_indices = @transform_5, window_bounds = array<i64: 48, 64>}]} {
    %c0 = arith.constant 0 : index
    %c0_0 = arith.constant 0 : index
    %0 = vector.load %arg1[%c0, %c0_0] : memref<48x64xbf16, #tpu.memory_space<vmem>>, vector<48x64xbf16>
    %c0_1 = arith.constant 0 : index
    %c0_2 = arith.constant 0 : index
    %1 = vector.load %arg2[%c0_1, %c0_2] : memref<64x64xbf16, #tpu.memory_space<vmem>>, vector<64x64xbf16>
    %cst = arith.constant dense<0.000000e+00> : vector<48x64xf32>
    %2 = tpu.matmul %0, %1, %cst {dimension_numbers = #tpu.dot_dimension_numbers<[1], [0], [0], [1], [0, 0, 1, 1], [], []>} : vector<48x64xbf16>, vector<64x64xbf16>, vector<48x64xf32> -> vector<48x64xf32>
    %c0_3 = arith.constant 0 : index
    %c0_4 = arith.constant 0 : index
    %3 = vector.load %arg3[%c0_3, %c0_4] : memref<1x64xf32, #tpu.memory_space<vmem>>, vector<1x64xf32>
    %4 = vector.broadcast %3 : vector<1x64xf32> to vector<48x64xf32>
    %5 = arith.addf %2, %4 : vector<48x64xf32>
    %cst_5 = arith.constant 0.000000e+00 : f32
    %6 = vector.broadcast %cst_5 : f32 to vector<48x64xf32>
    %7 = arith.maximumf %5, %6 : vector<48x64xf32>
    %8 = arith.truncf %7 : vector<48x64xf32> to vector<48x64xbf16>
    %c0_6 = arith.constant 0 : index
    %c0_7 = arith.constant 0 : index
    %9 = vector.load %arg4[%c0_6, %c0_7] : memref<64x64xbf16, #tpu.memory_space<vmem>>, vector<64x64xbf16>
    %cst_8 = arith.constant dense<0.000000e+00> : vector<48x64xf32>
    %10 = tpu.matmul %8, %9, %cst_8 {dimension_numbers = #tpu.dot_dimension_numbers<[1], [0], [0], [1], [0, 0, 1, 1], [], []>} : vector<48x64xbf16>, vector<64x64xbf16>, vector<48x64xf32> -> vector<48x64xf32>
    %c0_9 = arith.constant 0 : index
    %c0_10 = arith.constant 0 : index
    %11 = vector.load %arg5[%c0_9, %c0_10] : memref<1x64xf32, #tpu.memory_space<vmem>>, vector<1x64xf32>
    %12 = vector.broadcast %11 : vector<1x64xf32> to vector<48x64xf32>
    %13 = arith.addf %10, %12 : vector<48x64xf32>
    %14 = arith.truncf %13 : vector<48x64xf32> to vector<48x64xbf16>
    %c0_11 = arith.constant 0 : index
    %c0_12 = arith.constant 0 : index
    %15 = vector.load %arg6[%c0_11, %c0_12] : memref<48x64xbf16, #tpu.memory_space<vmem>>, vector<48x64xbf16>
    tpu.vector_store %arg6[%c0_11, %c0_12], %14 {strides = array<i32>} : memref<48x64xbf16, #tpu.memory_space<vmem>>, vector<48x64xbf16>,
    return
  }
  func.func @transform_0(%arg0: i32) -> (i32, i32) {
    %c0_i32 = arith.constant 0 : i32
    %c0_i32_0 = arith.constant 0 : i32
    return %arg0, %c0_i32 : i32, i32
  }
  func.func @transform_1(%arg0: i32) -> (i32, i32) {
    %c0_i32 = arith.constant 0 : i32
    %c0_i32_0 = arith.constant 0 : i32
    %c0_i32_1 = arith.constant 0 : i32
    return %c0_i32, %c0_i32_0 : i32, i32
  }
  func.func @transform_2(%arg0: i32) -> (i32, i32) {
    %c0_i32 = arith.constant 0 : i32
    %c0_i32_0 = arith.constant 0 : i32
    %c0_i32_1 = arith.constant 0 : i32
    return %c0_i32, %c0_i32_0 : i32, i32
  }
  func.func @transform_3(%arg0: i32) -> (i32, i32) {
    %c0_i32 = arith.constant 0 : i32
    %c0_i32_0 = arith.constant 0 : i32
    %c0_i32_1 = arith.constant 0 : i32
    return %c0_i32, %c0_i32_0 : i32, i32
  }
  func.func @transform_4(%arg0: i32) -> (i32, i32) {
    %c0_i32 = arith.constant 0 : i32
    %c0_i32_0 = arith.constant 0 : i32
    %c0_i32_1 = arith.constant 0 : i32
    return %c0_i32, %c0_i32_0 : i32, i32
  }
  func.func @transform_5(%arg0: i32) -> (i32, i32) {
    %c0_i32 = arith.constant 0 : i32
    %c0_i32_0 = arith.constant 0 : i32
    return %arg0, %c0_i32 : i32, i32
  }
}

module attributes {stable_mosaic.version = 11 : i64} {
  func.func @cross_attention_kernel(%arg0: i32, %arg1: memref<40x128xf32, #tpu.memory_space<vmem>>, %arg2: memref<128x1xi32, #tpu.memory_space<vmem>>, %arg3: memref<32x128xf32, #tpu.memory_space<vmem>>, %arg4: memref<1x128xi32, #tpu.memory_space<vmem>>, %arg5: memref<32x128xf32, #tpu.memory_space<vmem>>, %arg6: memref<32x128xf32, #tpu.memory_space<vmem>>, %arg7: memref<40x128xf32, #tpu.memory_space<vmem>>, %arg8: memref<1x128xf32, #tpu.memory_space<vmem>>) attributes {dimension_semantics = [#tpu.dimension_semantics<arbitrary>], iteration_bounds = array<i64: 1>, scalar_prefetch = 0 : i64, scratch_operands = 2 : i64, tpu.core_type = #tpu.core_type<tc>, window_params = [{transform_indices = @transform_0, window_bounds = array<i64: 40, 128>}, {transform_indices = @transform_1, window_bounds = array<i64: 128, 1>}, {pipeline_mode = #tpu.pipeline_mode<synchronous>, transform_indices = @transform_2, window_bounds = array<i64: 32, 128>}, {pipeline_mode = #tpu.pipeline_mode<synchronous>, transform_indices = @transform_3, window_bounds = array<i64: 1, 128>}, {transform_indices = @transform_4, window_bounds = array<i64: 32, 128>}, {pipeline_mode = #tpu.pipeline_mode<synchronous>, transform_indices = @transform_5, window_bounds = array<i64: 32, 128>}]} {
    %c0_i32 = arith.constant 0 : i32
    %0 = arith.cmpi eq, %arg0, %c0_i32 : i32
    %1 = arith.extui %0 : i1 to i32
    %c0_i32_0 = arith.constant 0 : i32
    %2 = arith.cmpi ne, %1, %c0_i32_0 : i32
    scf.if %2 {
      %cst_30 = arith.constant 0.000000e+00 : f32
      %59 = vector.broadcast %cst_30 : f32 to vector<40x128xf32>
      %c0_31 = arith.constant 0 : index
      %c0_32 = arith.constant 0 : index
      %60 = vector.load %arg7[%c0_31, %c0_32] : memref<40x128xf32, #tpu.memory_space<vmem>>, vector<40x128xf32>
      tpu.vector_store %arg7[%c0_31, %c0_32], %59 {strides = array<i32>} : memref<40x128xf32, #tpu.memory_space<vmem>>, vector<40x128xf32>,
      %cst_33 = arith.constant -1.000000e+30 : f32
      %61 = vector.broadcast %cst_33 : f32 to vector<1x128xf32>
      %c0_34 = arith.constant 0 : index
      %c0_35 = arith.constant 0 : index
      %62 = vector.load %arg8[%c0_34, %c0_35] : memref<1x128xf32, #tpu.memory_space<vmem>>, vector<1x128xf32>
      tpu.vector_store %arg8[%c0_34, %c0_35], %61 {strides = array<i32>} : memref<1x128xf32, #tpu.memory_space<vmem>>, vector<1x128xf32>,
    } else {
    }
    %c0 = arith.constant 0 : index
    %c0_1 = arith.constant 0 : index
    %3 = vector.load %arg1[%c0, %c0_1] : memref<40x128xf32, #tpu.memory_space<vmem>>, vector<40x128xf32>
    %4 = vector.extract_strided_slice %3 {offsets = [0, 0], sizes = [32, 128], strides = [1, 1]} : vector<40x128xf32> to vector<32x128xf32>
    %c0_2 = arith.constant 0 : index
    %c0_3 = arith.constant 0 : index
    %5 = vector.load %arg3[%c0_2, %c0_3] : memref<32x128xf32, #tpu.memory_space<vmem>>, vector<32x128xf32>
    %6 = arith.truncf %3 : vector<40x128xf32> to vector<40x128xbf16>
    %7 = arith.truncf %4 : vector<32x128xf32> to vector<32x128xbf16>
    %8 = arith.truncf %5 : vector<32x128xf32> to vector<32x128xbf16>
    %cst = arith.constant dense<0.000000e+00> : vector<128x128xf32>
    %9 = tpu.matmul %7, %8, %cst {dimension_numbers = #tpu.dot_dimension_numbers<[0], [0], [1], [1], [0, 1, 1, 1], [], []>} : vector<32x128xbf16>, vector<32x128xbf16>, vector<128x128xf32> -> vector<128x128xf32>
    %c0_4 = arith.constant 0 : index
    %c0_5 = arith.constant 0 : index
    %10 = vector.load %arg2[%c0_4, %c0_5] : memref<128x1xi32, #tpu.memory_space<vmem>>, vector<128x1xi32>
    %c0_6 = arith.constant 0 : index
    %c0_7 = arith.constant 0 : index
    %11 = vector.load %arg4[%c0_6, %c0_7] : memref<1x128xi32, #tpu.memory_space<vmem>>, vector<1x128xi32>
    %12 = vector.broadcast %10 : vector<128x1xi32> to vector<128x128xi32>
    %13 = vector.broadcast %11 : vector<1x128xi32> to vector<128x128xi32>
    %14 = arith.cmpi eq, %12, %13 : vector<128x128xi32>
    %cst_8 = arith.constant -1.000000e+30 : f32
    %15 = vector.broadcast %cst_8 : f32 to vector<128x128xf32>
    %16 = arith.select %14, %9, %15 : vector<128x128xi1>, vector<128x128xf32>
    %cst_9 = arith.constant dense<0xFF800000> : vector<128xf32>
    %17 = vector.multi_reduction <maximumf>, %16, %cst_9 [1] : vector<128x128xf32> to vector<128xf32>
    %18 = vector.shape_cast %17 : vector<128xf32> to vector<128x1xf32>
    %19 = vector.broadcast %18 : vector<128x1xf32> to vector<128x128xf32>
    %20 = arith.subf %16, %19 : vector<128x128xf32>
    %21 = math.exp %20 : vector<128x128xf32>
    %cst_10 = arith.constant 0.000000e+00 : f32
    %22 = vector.broadcast %cst_10 : f32 to vector<128x128xf32>
    %23 = arith.select %14, %21, %22 : vector<128x128xi1>, vector<128x128xf32>
    %cst_11 = arith.constant dense<0.000000e+00> : vector<128xf32>
    %24 = vector.multi_reduction <add>, %23, %cst_11 [1] : vector<128x128xf32> to vector<128xf32>
    %25 = vector.shape_cast %24 : vector<128xf32> to vector<128x1xf32>
    %cst_12 = arith.constant 0.000000e+00 : f32
    %26 = vector.broadcast %cst_12 : f32 to vector<128x1xf32>
    %27 = arith.cmpf ogt, %25, %26 : vector<128x1xf32>
    %cst_13 = arith.constant 1.000000e+00 : f32
    %28 = vector.broadcast %cst_13 : f32 to vector<128x1xf32>
    %29 = arith.select %27, %25, %28 : vector<128x1xi1>, vector<128x1xf32>
    %30 = tpu.reciprocal %29 : vector<128x1xf32> -> vector<128x1xf32>
    %31 = vector.broadcast %30 : vector<128x1xf32> to vector<128x128xf32>
    %32 = arith.mulf %23, %31 : vector<128x128xf32>
    %33 = arith.truncf %32 : vector<128x128xf32> to vector<128x128xbf16>
    %cst_14 = arith.constant dense<0.000000e+00> : vector<32x128xf32>
    %34 = tpu.matmul %8, %33, %cst_14 {dimension_numbers = #tpu.dot_dimension_numbers<[1], [1], [0], [0], [0, 0, 1, 0], [], []>} : vector<32x128xbf16>, vector<128x128xbf16>, vector<32x128xf32> -> vector<32x128xf32>
    %35 = arith.subf %4, %34 : vector<32x128xf32>
    %c0_15 = arith.constant 0 : index
    %c0_16 = arith.constant 0 : index
    %36 = vector.load %arg5[%c0_15, %c0_16] : memref<32x128xf32, #tpu.memory_space<vmem>>, vector<32x128xf32>
    tpu.vector_store %arg5[%c0_15, %c0_16], %35 {strides = array<i32>} : memref<32x128xf32, #tpu.memory_space<vmem>>, vector<32x128xf32>,
    %c0_17 = arith.constant 0 : index
    %c0_18 = arith.constant 0 : index
    %37 = vector.load %arg8[%c0_17, %c0_18] : memref<1x128xf32, #tpu.memory_space<vmem>>, vector<1x128xf32>
    %cst_19 = arith.constant dense<0xFF800000> : vector<128xf32>
    %38 = vector.multi_reduction <maximumf>, %16, %cst_19 [0] : vector<128x128xf32> to vector<128xf32>
    %39 = vector.shape_cast %38 : vector<128xf32> to vector<1x128xf32>
    %40 = arith.maximumf %37, %39 : vector<1x128xf32>
    %41 = vector.broadcast %40 : vector<1x128xf32> to vector<128x128xf32>
    %42 = arith.subf %16, %41 : vector<128x128xf32>
    %43 = math.exp %42 : vector<128x128xf32>
    %cst_20 = arith.constant 0.000000e+00 : f32
    %44 = vector.broadcast %cst_20 : f32 to vector<128x128xf32>
    %45 = arith.select %14, %43, %44 : vector<128x128xi1>, vector<128x128xf32>
    %46 = arith.subf %37, %40 : vector<1x128xf32>
    %47 = math.exp %46 : vector<1x128xf32>
    %c0_21 = arith.constant 0 : index
    %c0_22 = arith.constant 0 : index
    %48 = vector.load %arg7[%c0_21, %c0_22] : memref<40x128xf32, #tpu.memory_space<vmem>>, vector<40x128xf32>
    %49 = vector.broadcast %47 : vector<1x128xf32> to vector<40x128xf32>
    %50 = arith.mulf %48, %49 : vector<40x128xf32>
    %51 = arith.truncf %45 : vector<128x128xf32> to vector<128x128xbf16>
    %cst_23 = arith.constant dense<0.000000e+00> : vector<40x128xf32>
    %52 = tpu.matmul %6, %51, %cst_23 {dimension_numbers = #tpu.dot_dimension_numbers<[1], [0], [0], [1], [0, 0, 1, 1], [], []>} : vector<40x128xbf16>, vector<128x128xbf16>, vector<40x128xf32> -> vector<40x128xf32>
    %53 = arith.addf %50, %52 : vector<40x128xf32>
    %c0_24 = arith.constant 0 : index
    %c0_25 = arith.constant 0 : index
    %54 = vector.load %arg7[%c0_24, %c0_25] : memref<40x128xf32, #tpu.memory_space<vmem>>, vector<40x128xf32>
    tpu.vector_store %arg7[%c0_24, %c0_25], %53 {strides = array<i32>} : memref<40x128xf32, #tpu.memory_space<vmem>>, vector<40x128xf32>,
    %c0_26 = arith.constant 0 : index
    %c0_27 = arith.constant 0 : index
    %55 = vector.load %arg8[%c0_26, %c0_27] : memref<1x128xf32, #tpu.memory_space<vmem>>, vector<1x128xf32>
    tpu.vector_store %arg8[%c0_26, %c0_27], %40 {strides = array<i32>} : memref<1x128xf32, #tpu.memory_space<vmem>>, vector<1x128xf32>,
    %c0_i32_28 = arith.constant 0 : i32
    %56 = arith.cmpi eq, %arg0, %c0_i32_28 : i32
    %57 = arith.extui %56 : i1 to i32
    %c0_i32_29 = arith.constant 0 : i32
    %58 = arith.cmpi ne, %57, %c0_i32_29 : i32
    scf.if %58 {
      %c32 = arith.constant 32 : index
      %c0_30 = arith.constant 0 : index
      %59 = vector.load %arg7[%c32, %c0_30] : memref<40x128xf32, #tpu.memory_space<vmem>>, vector<1x128xf32>
      %cst_31 = arith.constant 0.000000e+00 : f32
      %60 = vector.broadcast %cst_31 : f32 to vector<1x128xf32>
      %61 = arith.cmpf ogt, %59, %60 : vector<1x128xf32>
      %cst_32 = arith.constant 1.000000e+00 : f32
      %62 = vector.broadcast %cst_32 : f32 to vector<1x128xf32>
      %63 = arith.select %61, %59, %62 : vector<1x128xi1>, vector<1x128xf32>
      %64 = tpu.reciprocal %63 : vector<1x128xf32> -> vector<1x128xf32>
      %c0_33 = arith.constant 0 : index
      %c0_34 = arith.constant 0 : index
      %65 = vector.load %arg7[%c0_33, %c0_34] : memref<40x128xf32, #tpu.memory_space<vmem>>, vector<32x128xf32>
      %66 = vector.broadcast %64 : vector<1x128xf32> to vector<32x128xf32>
      %67 = arith.mulf %65, %66 : vector<32x128xf32>
      %68 = arith.subf %5, %67 : vector<32x128xf32>
      %c0_35 = arith.constant 0 : index
      %c0_36 = arith.constant 0 : index
      %69 = vector.load %arg6[%c0_35, %c0_36] : memref<32x128xf32, #tpu.memory_space<vmem>>, vector<32x128xf32>
      tpu.vector_store %arg6[%c0_35, %c0_36], %68 {strides = array<i32>} : memref<32x128xf32, #tpu.memory_space<vmem>>, vector<32x128xf32>,
    } else {
    }
    return
  }
  func.func @transform_0(%arg0: i32) -> (i32, i32) {
    %c0_i32 = arith.constant 0 : i32
    %c0_i32_0 = arith.constant 0 : i32
    return %c0_i32, %arg0 : i32, i32
  }
  func.func @transform_1(%arg0: i32) -> (i32, i32) {
    %c0_i32 = arith.constant 0 : i32
    %c0_i32_0 = arith.constant 0 : i32
    return %arg0, %c0_i32 : i32, i32
  }
  func.func @transform_2(%arg0: i32) -> (i32, i32) {
    %c0_i32 = arith.constant 0 : i32
    %c0_i32_0 = arith.constant 0 : i32
    %c0_i32_1 = arith.constant 0 : i32
    return %c0_i32, %c0_i32_0 : i32, i32
  }
  func.func @transform_3(%arg0: i32) -> (i32, i32) {
    %c0_i32 = arith.constant 0 : i32
    %c0_i32_0 = arith.constant 0 : i32
    %c0_i32_1 = arith.constant 0 : i32
    return %c0_i32, %c0_i32_0 : i32, i32
  }
  func.func @transform_4(%arg0: i32) -> (i32, i32) {
    %c0_i32 = arith.constant 0 : i32
    %c0_i32_0 = arith.constant 0 : i32
    return %c0_i32, %arg0 : i32, i32
  }
  func.func @transform_5(%arg0: i32) -> (i32, i32) {
    %c0_i32 = arith.constant 0 : i32
    %c0_i32_0 = arith.constant 0 : i32
    %c0_i32_1 = arith.constant 0 : i32
    return %c0_i32, %c0_i32_0 : i32, i32
  }
}

module attributes {stable_mosaic.version = 11 : i64} {
  func.func @scatter_update_kernel(%arg0: i32, %arg1: i32, %arg2: memref<1x48xi32, #tpu.memory_space<vmem>>, %arg3: memref<48x64xbf16, #tpu.memory_space<vmem>>, %arg4: memref<24x64xbf16, #tpu.memory_space<vmem>>, %arg5: memref<24x32xf32, #tpu.memory_space<vmem>>, %arg6: memref<128x64xbf16, #tpu.memory_space<vmem>>, %arg7: memref<1x64xf32, #tpu.memory_space<vmem>>, %arg8: memref<64x32xbf16, #tpu.memory_space<vmem>>, %arg9: memref<1x32xf32, #tpu.memory_space<vmem>>, %arg10: memref<32x32xbf16, #tpu.memory_space<vmem>>, %arg11: memref<1x32xf32, #tpu.memory_space<vmem>>, %arg12: memref<24x32xf32, #tpu.memory_space<vmem>>, %arg13: memref<24x64xf32, #tpu.memory_space<vmem>>) attributes {dimension_semantics = [#tpu.dimension_semantics<parallel>, #tpu.dimension_semantics<arbitrary>], iteration_bounds = array<i64: 1, 1>, scalar_prefetch = 0 : i64, scratch_operands = 1 : i64, tpu.core_type = #tpu.core_type<tc>, window_params = [{transform_indices = @transform_0, window_bounds = array<i64: 1, 48>}, {transform_indices = @transform_1, window_bounds = array<i64: 48, 64>}, {transform_indices = @transform_2, window_bounds = array<i64: 24, 64>}, {transform_indices = @transform_3, window_bounds = array<i64: 24, 32>}, {pipeline_mode = #tpu.pipeline_mode<synchronous>, transform_indices = @transform_4, window_bounds = array<i64: 128, 64>}, {pipeline_mode = #tpu.pipeline_mode<synchronous>, transform_indices = @transform_5, window_bounds = array<i64: 1, 64>}, {pipeline_mode = #tpu.pipeline_mode<synchronous>, transform_indices = @transform_6, window_bounds = array<i64: 64, 32>}, {pipeline_mode = #tpu.pipeline_mode<synchronous>, transform_indices = @transform_7, window_bounds = array<i64: 1, 32>}, {pipeline_mode = #tpu.pipeline_mode<synchronous>, transform_indices = @transform_8, window_bounds = array<i64: 32, 32>}, {pipeline_mode = #tpu.pipeline_mode<synchronous>, transform_indices = @transform_9, window_bounds = array<i64: 1, 32>}, {transform_indices = @transform_10, window_bounds = array<i64: 24, 32>}]} {
    %c0_i32 = arith.constant 0 : i32
    %0 = arith.cmpi eq, %arg1, %c0_i32 : i32
    %1 = arith.extui %0 : i1 to i32
    %c0_i32_0 = arith.constant 0 : i32
    %2 = arith.cmpi ne, %1, %c0_i32_0 : i32
    scf.if %2 {
      %cst_10 = arith.constant 0.000000e+00 : f32
      %21 = vector.broadcast %cst_10 : f32 to vector<24x64xf32>
      %c0_11 = arith.constant 0 : index
      %c0_12 = arith.constant 0 : index
      %22 = vector.load %arg13[%c0_11, %c0_12] : memref<24x64xf32, #tpu.memory_space<vmem>>, vector<24x64xf32>
      tpu.vector_store %arg13[%c0_11, %c0_12], %21 {strides = array<i32>} : memref<24x64xf32, #tpu.memory_space<vmem>>, vector<24x64xf32>,
    } else {
    }
    %c0 = arith.constant 0 : index
    %c0_1 = arith.constant 0 : index
    %3 = vector.load %arg2[%c0, %c0_1] : memref<1x48xi32, #tpu.memory_space<vmem>>, vector<1x48xi32>
    %c24_i32 = arith.constant 24 : i32
    %4 = arith.muli %arg0, %c24_i32 : i32
    %5 = vector.broadcast %4 : i32 to vector<1x48xi32>
    %6 = arith.subi %3, %5 : vector<1x48xi32>
    %7 = tpu.iota {dimensions = array<i32: 0>} : vector<24x48xi32>
    %8 = vector.broadcast %6 : vector<1x48xi32> to vector<24x48xi32>
    %9 = arith.cmpi eq, %7, %8 : vector<24x48xi32>
    %10 = arith.extui %9 : vector<24x48xi1> to vector<24x48xi32>
    %11 = arith.sitofp %10 : vector<24x48xi32> to vector<24x48xf32>
    %12 = arith.truncf %11 : vector<24x48xf32> to vector<24x48xbf16>
    %c0_2 = arith.constant 0 : index
    %c0_3 = arith.constant 0 : index
    %13 = vector.load %arg13[%c0_2, %c0_3] : memref<24x64xf32, #tpu.memory_space<vmem>>, vector<24x64xf32>
    %c0_4 = arith.constant 0 : index
    %c0_5 = arith.constant 0 : index
    %14 = vector.load %arg3[%c0_4, %c0_5] : memref<48x64xbf16, #tpu.memory_space<vmem>>, vector<48x64xbf16>
    %cst = arith.constant dense<0.000000e+00> : vector<24x64xf32>
    %15 = tpu.matmul %12, %14, %cst {dimension_numbers = #tpu.dot_dimension_numbers<[1], [0], [0], [1], [0, 0, 1, 1], [], []>} : vector<24x48xbf16>, vector<48x64xbf16>, vector<24x64xf32> -> vector<24x64xf32>
    %16 = arith.addf %13, %15 : vector<24x64xf32>
    %c0_6 = arith.constant 0 : index
    %c0_7 = arith.constant 0 : index
    %17 = vector.load %arg13[%c0_6, %c0_7] : memref<24x64xf32, #tpu.memory_space<vmem>>, vector<24x64xf32>
    tpu.vector_store %arg13[%c0_6, %c0_7], %16 {strides = array<i32>} : memref<24x64xf32, #tpu.memory_space<vmem>>, vector<24x64xf32>,
    %c0_i32_8 = arith.constant 0 : i32
    %18 = arith.cmpi eq, %arg1, %c0_i32_8 : i32
    %19 = arith.extui %18 : i1 to i32
    %c0_i32_9 = arith.constant 0 : i32
    %20 = arith.cmpi ne, %19, %c0_i32_9 : i32
    scf.if %20 {
      %c0_10 = arith.constant 0 : index
      %c0_11 = arith.constant 0 : index
      %21 = vector.load %arg13[%c0_10, %c0_11] : memref<24x64xf32, #tpu.memory_space<vmem>>, vector<24x64xf32>
      %22 = arith.truncf %21 : vector<24x64xf32> to vector<24x64xbf16>
      %c0_12 = arith.constant 0 : index
      %c0_13 = arith.constant 0 : index
      %23 = vector.load %arg4[%c0_12, %c0_13] : memref<24x64xbf16, #tpu.memory_space<vmem>>, vector<24x64xbf16>
      %24 = tpu.concatenate %22, %23 in 1 : vector<24x64xbf16>, vector<24x64xbf16> -> vector<24x128xbf16>
      %c0_14 = arith.constant 0 : index
      %c0_15 = arith.constant 0 : index
      %25 = vector.load %arg6[%c0_14, %c0_15] : memref<128x64xbf16, #tpu.memory_space<vmem>>, vector<128x64xbf16>
      %cst_16 = arith.constant dense<0.000000e+00> : vector<24x64xf32>
      %26 = tpu.matmul %24, %25, %cst_16 {dimension_numbers = #tpu.dot_dimension_numbers<[1], [0], [0], [1], [0, 0, 1, 1], [], []>} : vector<24x128xbf16>, vector<128x64xbf16>, vector<24x64xf32> -> vector<24x64xf32>
      %c0_17 = arith.constant 0 : index
      %c0_18 = arith.constant 0 : index
      %27 = vector.load %arg7[%c0_17, %c0_18] : memref<1x64xf32, #tpu.memory_space<vmem>>, vector<1x64xf32>
      %28 = vector.broadcast %27 : vector<1x64xf32> to vector<24x64xf32>
      %29 = arith.addf %26, %28 : vector<24x64xf32>
      %cst_19 = arith.constant 0.000000e+00 : f32
      %30 = vector.broadcast %cst_19 : f32 to vector<24x64xf32>
      %31 = arith.maximumf %29, %30 : vector<24x64xf32>
      %32 = arith.truncf %31 : vector<24x64xf32> to vector<24x64xbf16>
      %c0_20 = arith.constant 0 : index
      %c0_21 = arith.constant 0 : index
      %33 = vector.load %arg8[%c0_20, %c0_21] : memref<64x32xbf16, #tpu.memory_space<vmem>>, vector<64x32xbf16>
      %cst_22 = arith.constant dense<0.000000e+00> : vector<24x32xf32>
      %34 = tpu.matmul %32, %33, %cst_22 {dimension_numbers = #tpu.dot_dimension_numbers<[1], [0], [0], [1], [0, 0, 1, 1], [], []>} : vector<24x64xbf16>, vector<64x32xbf16>, vector<24x32xf32> -> vector<24x32xf32>
      %c0_23 = arith.constant 0 : index
      %c0_24 = arith.constant 0 : index
      %35 = vector.load %arg9[%c0_23, %c0_24] : memref<1x32xf32, #tpu.memory_space<vmem>>, vector<1x32xf32>
      %36 = vector.broadcast %35 : vector<1x32xf32> to vector<24x32xf32>
      %37 = arith.addf %34, %36 : vector<24x32xf32>
      %cst_25 = arith.constant 0.000000e+00 : f32
      %38 = vector.broadcast %cst_25 : f32 to vector<24x32xf32>
      %39 = arith.maximumf %37, %38 : vector<24x32xf32>
      %40 = arith.truncf %39 : vector<24x32xf32> to vector<24x32xbf16>
      %c0_26 = arith.constant 0 : index
      %c0_27 = arith.constant 0 : index
      %41 = vector.load %arg10[%c0_26, %c0_27] : memref<32x32xbf16, #tpu.memory_space<vmem>>, vector<32x32xbf16>
      %cst_28 = arith.constant dense<0.000000e+00> : vector<24x32xf32>
      %42 = tpu.matmul %40, %41, %cst_28 {dimension_numbers = #tpu.dot_dimension_numbers<[1], [0], [0], [1], [0, 0, 1, 1], [], []>} : vector<24x32xbf16>, vector<32x32xbf16>, vector<24x32xf32> -> vector<24x32xf32>
      %c0_29 = arith.constant 0 : index
      %c0_30 = arith.constant 0 : index
      %43 = vector.load %arg11[%c0_29, %c0_30] : memref<1x32xf32, #tpu.memory_space<vmem>>, vector<1x32xf32>
      %44 = vector.broadcast %43 : vector<1x32xf32> to vector<24x32xf32>
      %45 = arith.addf %42, %44 : vector<24x32xf32>
      %c0_31 = arith.constant 0 : index
      %c0_32 = arith.constant 0 : index
      %46 = vector.load %arg5[%c0_31, %c0_32] : memref<24x32xf32, #tpu.memory_space<vmem>>, vector<24x32xf32>
      %47 = arith.addf %46, %45 : vector<24x32xf32>
      %c0_33 = arith.constant 0 : index
      %c0_34 = arith.constant 0 : index
      %48 = vector.load %arg12[%c0_33, %c0_34] : memref<24x32xf32, #tpu.memory_space<vmem>>, vector<24x32xf32>
      tpu.vector_store %arg12[%c0_33, %c0_34], %47 {strides = array<i32>} : memref<24x32xf32, #tpu.memory_space<vmem>>, vector<24x32xf32>,
    } else {
    }
    return
  }
  func.func @transform_0(%arg0: i32, %arg1: i32) -> (i32, i32) {
    %c0_i32 = arith.constant 0 : i32
    %c0_i32_0 = arith.constant 0 : i32
    return %c0_i32, %arg1 : i32, i32
  }
  func.func @transform_1(%arg0: i32, %arg1: i32) -> (i32, i32) {
    %c0_i32 = arith.constant 0 : i32
    %c0_i32_0 = arith.constant 0 : i32
    return %arg1, %c0_i32 : i32, i32
  }
  func.func @transform_2(%arg0: i32, %arg1: i32) -> (i32, i32) {
    %c0_i32 = arith.constant 0 : i32
    %c0_i32_0 = arith.constant 0 : i32
    return %arg0, %c0_i32 : i32, i32
  }
  func.func @transform_3(%arg0: i32, %arg1: i32) -> (i32, i32) {
    %c0_i32 = arith.constant 0 : i32
    %c0_i32_0 = arith.constant 0 : i32
    return %arg0, %c0_i32 : i32, i32
  }
  func.func @transform_4(%arg0: i32, %arg1: i32) -> (i32, i32) {
    %c0_i32 = arith.constant 0 : i32
    %c0_i32_0 = arith.constant 0 : i32
    %c0_i32_1 = arith.constant 0 : i32
    return %c0_i32, %c0_i32_0 : i32, i32
  }
  func.func @transform_5(%arg0: i32, %arg1: i32) -> (i32, i32) {
    %c0_i32 = arith.constant 0 : i32
    %c0_i32_0 = arith.constant 0 : i32
    %c0_i32_1 = arith.constant 0 : i32
    return %c0_i32, %c0_i32_0 : i32, i32
  }
  func.func @transform_6(%arg0: i32, %arg1: i32) -> (i32, i32) {
    %c0_i32 = arith.constant 0 : i32
    %c0_i32_0 = arith.constant 0 : i32
    %c0_i32_1 = arith.constant 0 : i32
    return %c0_i32, %c0_i32_0 : i32, i32
  }
  func.func @transform_7(%arg0: i32, %arg1: i32) -> (i32, i32) {
    %c0_i32 = arith.constant 0 : i32
    %c0_i32_0 = arith.constant 0 : i32
    %c0_i32_1 = arith.constant 0 : i32
    return %c0_i32, %c0_i32_0 : i32, i32
  }
  func.func @transform_8(%arg0: i32, %arg1: i32) -> (i32, i32) {
    %c0_i32 = arith.constant 0 : i32
    %c0_i32_0 = arith.constant 0 : i32
    %c0_i32_1 = arith.constant 0 : i32
    return %c0_i32, %c0_i32_0 : i32, i32
  }
  func.func @transform_9(%arg0: i32, %arg1: i32) -> (i32, i32) {
    %c0_i32 = arith.constant 0 : i32
    %c0_i32_0 = arith.constant 0 : i32
    %c0_i32_1 = arith.constant 0 : i32
    return %c0_i32, %c0_i32_0 : i32, i32
  }
  func.func @transform_10(%arg0: i32, %arg1: i32) -> (i32, i32) {
    %c0_i32 = arith.constant 0 : i32
    %c0_i32_0 = arith.constant 0 : i32
    return %arg0, %c0_i32 : i32, i32
  }
}

</mosaic_0001>

<llo_original>
// kernel: gmn_conv_forward.3
$region0: #{gmn_conv_forward.3}
  #allocation0 [shape = 'u32[]', space=smem, size = 0x4, offset = 0x4, fixed_abs, tag = 'smem constant byte address 0x4 - core index']
  #allocation1 [shape = 'u32[144,128]{1,0:T(1,128)}', space=vmem, size = 0x12000, scoped, tag = 'internal scratch']
  %s0 = inlined_call_operand.vmem [shape: bf16[48,64], index: 0, kind: input, shape index: {}]
  %s1 = inlined_call_operand.vmem [shape: bf16[64,64], index: 1, kind: input, shape index: {}]
  %s2 = inlined_call_operand.vmem [shape: f32[1,64], index: 2, kind: input, shape index: {}]
  %s3 = inlined_call_operand.vmem [shape: bf16[64,64], index: 3, kind: input, shape index: {}]
  %s4 = inlined_call_operand.vmem [shape: f32[1,64], index: 4, kind: input, shape index: {}]
  %s5 = inlined_call_operand.vmem [shape: bf16[48,64], index: 5, kind: output, shape index: {}]
  %s6 = sld [smem:[#allocation0]]
  $region30: #{gmn_conv_forward.3} parent=0
    _
  %s8 = ssub.s32 1, %s6
  %s9 = scalar_select 0, %s8, %s6
  // Predicated region
  $region2: #{gmn_conv_forward.3} parent=0 // pred_check
    _
  $region3: #{gmn_conv_forward.3} parent=0 // pred_check_branch
    %11 = sbr.rel (0) target = $region5
  $region4: #{gmn_conv_forward.3} parent=0 // pred_region
    _
  $region5: #{gmn_conv_forward.3} parent=0 // pred_fallthru
    _
  // Predicated region
  $region6: #{gmn_conv_forward.3} parent=0 // pred_check
    _
  $region7: #{gmn_conv_forward.3} parent=0 // pred_check_branch
    %13 = sbr.rel (0) target = $region9
  $region8: #{gmn_conv_forward.3} parent=0 // pred_region
    _
  $region9: #{gmn_conv_forward.3} parent=0 // pred_fallthru
    _
  // Predicated region
  $region10: #{gmn_conv_forward.3} parent=0 // pred_check
    _
  $region11: #{gmn_conv_forward.3} parent=0 // pred_check_branch
    %15 = sbr.rel (0) target = $region13
  $region12: #{gmn_conv_forward.3} parent=0 // pred_region
    _
  $region13: #{gmn_conv_forward.3} parent=0 // pred_fallthru
    _
  // Predicated region
  $region14: #{gmn_conv_forward.3} parent=0 // pred_check
    _
  $region15: #{gmn_conv_forward.3} parent=0 // pred_check_branch
    %17 = sbr.rel (0) target = $region17
  $region16: #{gmn_conv_forward.3} parent=0 // pred_region
    _
  $region17: #{gmn_conv_forward.3} parent=0 // pred_fallthru
    _
  // Predicated region
  $region18: #{gmn_conv_forward.3} parent=0 // pred_check
    _
  $region19: #{gmn_conv_forward.3} parent=0 // pred_check_branch
    %19 = sbr.rel (0) target = $region21
  $region20: #{gmn_conv_forward.3} parent=0 // pred_region
    _
  $region21: #{gmn_conv_forward.3} parent=0 // pred_fallthru
    _
  %v21 = vld [vmem:[%s0] sm:$0xf]
  %v22 = vld [vmem:[%s0 + $0x4] sm:$0xf]
  %v23 = vld [vmem:[%s0 + $0x8] sm:$0xf]
  %v24 = vld [vmem:[%s0 + $0xc] sm:$0xf]
  %v25 = vld [vmem:[%s0 + $0x10] sm:$0xf]
  %v26 = vld [vmem:[%s0 + $0x14] sm:$0xf]
  %v27 = vld [vmem:[%s1] sm:$0xf]
  %v28 = vld [vmem:[%s1 + $0x4] sm:$0xf]
  %v29 = vld [vmem:[%s1 + $0x8] sm:$0xf]
  %v30 = vld [vmem:[%s1 + $0xc] sm:$0xf]
  %v31 = vld [vmem:[%s1 + $0x10] sm:$0xf]
  %v32 = vld [vmem:[%s1 + $0x14] sm:$0xf]
  %v33 = vld [vmem:[%s1 + $0x18] sm:$0xf]
  %v34 = vld [vmem:[%s1 + $0x1c] sm:$0xf]
  %v35 = vld [vmem:[%s2] sm:$0x1]
  %v37 = vlaneseq
  %v38 = vshrl.u32 %v37, 7
  %v39 = vsub.s32 0, %v38
  %v40 = vrot.slane %v35, %v39
  %v48 = vunpack.c.l.b16 %v21
  %v49 = vunpack.c.l.b16 %v22
  %v50 = vunpack.c.l.b16 %v23
  %v51 = vunpack.c.l.b16 %v24
  %v52 = vunpack.c.l.b16 %v25
  %v53 = vunpack.c.l.b16 %v26
  %v54 = vpack.c.b16 %v49, %v48
  %v55 = vpack.c.b16 %v51, %v50
  %v56 = vpack.c.b16 %v53, %v52
  %v65 = vunpack.c.l.b16 %v27
  %v66 = vunpack.c.l.b16 %v28
  %v67 = vunpack.c.l.b16 %v29
  %v68 = vunpack.c.l.b16 %v30
  %v69 = vunpack.c.l.b16 %v31
  %v70 = vunpack.c.l.b16 %v32
  %v71 = vunpack.c.l.b16 %v33
  %v72 = vunpack.c.l.b16 %v34
  %v73 = vpack.c.b16 %v66, %v65
  %v74 = vpack.c.b16 %v68, %v67
  %v75 = vpack.c.b16 %v70, %v69
  %v76 = vpack.c.b16 %v72, %v71
  %vm81 = vcmask 523264
  %v83 = vsel %vm81, %v54, 0
  %v86 = vsel %vm81, %v55, 0
  %v89 = vsel %vm81, %v56, 0
  %91 = vmatprep.subr.bf16.mxu0 0
  %92 = vmatpush1.bf16.msra.mxu0 0
  %93 = vmatprep.subr.bf16.mxu0 0
  %94 = vmatpush1.bf16.msra.mxu0 0
  %95 = vmatprep.subr.bf16.mxu0 0
  %96 = vmatpush1.bf16.msra.mxu0 0
  %97 = vmatprep.subr.bf16.mxu0 0
  %98 = vmatpush1.bf16.msra.mxu0 0
  %99 = vmatprep.subr.bf16.mxu0 0
  %100 = vmatpush1.bf16.msra.mxu0 %v76
  %101 = vmatprep.subr.bf16.mxu0 0
  %102 = vmatpush1.bf16.msra.mxu0 %v75
  %103 = vmatprep.subr.bf16.mxu0 0
  %104 = vmatpush1.bf16.msra.mxu0 %v74
  %105 = vmatprep.subr.bf16.mxu0 0
  %106 = vmatpush1.bf16.msra.mxu0 %v73
  %107 = vmatprep.subr.bf16.mxu0 0
  %108 = vmatpush2.bf16.msra.mxu0 0
  %109 = vmatprep.subr.bf16.mxu0 0
  %110 = vmatpush2.bf16.msra.mxu0 0
  %111 = vmatprep.subr.bf16.mxu0 0
  %112 = vmatpush2.bf16.msra.mxu0 0
  %113 = vmatprep.subr.bf16.mxu0 0
  %114 = vmatpush2.bf16.msra.mxu0 0
  %115 = vmatprep.subr.bf16.mxu0 0
  %116 = vmatpush2.bf16.msra.mxu0 0
  %117 = vmatprep.subr.bf16.mxu0 0
  %118 = vmatpush2.bf16.msra.mxu0 0
  %119 = vmatprep.subr.bf16.mxu0 0
  %120 = vmatpush2.bf16.msra.mxu0 0
  %121 = vmatprep.subr.bf16.mxu0 0
  %122 = vmatpush2.bf16.msra.mxu0 0
  %123 = vmatprep.mubr.bf16.mxu0 0
  %124 = vmatmul.mubr.bf16.gmra.mxu0 %v83
  %v125 = vpop.f32.mrf.mxu0
  %v126 = vadd.f32 %v40, %v125
  %v127 = vpop.f32.mrf.mxu0
  %v128 = vpop.f32.mrf.mxu0
  %v129 = vadd.f32 %v40, %v128
  %v130 = vpop.f32.mrf.mxu0
  %131 = vmatprep.mubr.bf16.mxu0 0
  %132 = vmatmul.mubr.bf16.gmra.mxu0 %v86
  %v133 = vpop.f32.mrf.mxu0
  %v134 = vadd.f32 %v40, %v133
  %v135 = vpop.f32.mrf.mxu0
  %v136 = vpop.f32.mrf.mxu0
  %v137 = vadd.f32 %v40, %v136
  %v138 = vpop.f32.mrf.mxu0
  %139 = vmatprep.mubr.bf16.mxu0 0
  %140 = vmatmul.mubr.bf16.gmra.mxu0 %v89
  %v141 = vpop.f32.mrf.mxu0
  %v142 = vadd.f32 %v40, %v141
  %v143 = vpop.f32.mrf.mxu0
  %v144 = vpop.f32.mrf.mxu0
  %v145 = vadd.f32 %v40, %v144
  %v146 = vpop.f32.mrf.mxu0
  %147 = vdwg.mxu0
  %v148 = vmax.f32 %v126, 0.0
  %v149 = vmax.f32 %v129, 0.0
  %v150 = vmax.f32 %v134, 0.0
  %v151 = vmax.f32 %v137, 0.0
  %v152 = vmax.f32 %v142, 0.0
  %v153 = vmax.f32 %v145, 0.0
  %v154 = vpack.c.bf16 %v149, %v148
  %v155 = vpack.c.bf16 %v151, %v150
  %v156 = vpack.c.bf16 %v153, %v152
  %v157 = vld [vmem:[%s3] sm:$0xf]
  %v158 = vld [vmem:[%s3 + $0x4] sm:$0xf]
  %v159 = vld [vmem:[%s3 + $0x8] sm:$0xf]
  %v160 = vld [vmem:[%s3 + $0xc] sm:$0xf]
  %v161 = vld [vmem:[%s3 + $0x10] sm:$0xf]
  %v162 = vld [vmem:[%s3 + $0x14] sm:$0xf]
  %v163 = vld [vmem:[%s3 + $0x18] sm:$0xf]
  %v164 = vld [vmem:[%s3 + $0x1c] sm:$0xf]
  %v165 = vld [vmem:[%s4] sm:$0x1]
  %v167 = vlaneseq
  %v168 = vshrl.u32 %v167, 7
  %v169 = vsub.s32 0, %v168
  %v170 = vrot.slane %v165, %v169
  %v180 = vunpack.c.l.b16 %v157
  %v181 = vunpack.c.l.b16 %v158
  %v182 = vunpack.c.l.b16 %v159
  %v183 = vunpack.c.l.b16 %v160
  %v184 = vunpack.c.l.b16 %v161
  %v185 = vunpack.c.l.b16 %v162
  %v186 = vunpack.c.l.b16 %v163
  %v187 = vunpack.c.l.b16 %v164
  %v188 = vpack.c.b16 %v181, %v180
  %v189 = vpack.c.b16 %v183, %v182
  %v190 = vpack.c.b16 %v185, %v184
  %v191 = vpack.c.b16 %v187, %v186
  %v197 = vsel %vm81, %v154, 0
  %v200 = vsel %vm81, %v155, 0
  %v203 = vsel %vm81, %v156, 0
  %205 = vmatprep.subr.bf16.mxu0 0
  %206 = vmatpush1.bf16.msra.mxu0 0
  %207 = vmatprep.subr.bf16.mxu0 0
  %208 = vmatpush1.bf16.msra.mxu0 0
  %209 = vmatprep.subr.bf16.mxu0 0
  %210 = vmatpush1.bf16.msra.mxu0 0
  %211 = vmatprep.subr.bf16.mxu0 0
  %212 = vmatpush1.bf16.msra.mxu0 0
  %213 = vmatprep.subr.bf16.mxu0 0
  %214 = vmatpush1.bf16.msra.mxu0 %v191
  %215 = vmatprep.subr.bf16.mxu0 0
  %216 = vmatpush1.bf16.msra.mxu0 %v190
  %217 = vmatprep.subr.bf16.mxu0 0
  %218 = vmatpush1.bf16.msra.mxu0 %v189
  %219 = vmatprep.subr.bf16.mxu0 0
  %220 = vmatpush1.bf16.msra.mxu0 %v188
  %221 = vmatprep.subr.bf16.mxu0 0
  %222 = vmatpush2.bf16.msra.mxu0 0
  %223 = vmatprep.subr.bf16.mxu0 0
  %224 = vmatpush2.bf16.msra.mxu0 0
  %225 = vmatprep.subr.bf16.mxu0 0
  %226 = vmatpush2.bf16.msra.mxu0 0
  %227 = vmatprep.subr.bf16.mxu0 0
  %228 = vmatpush2.bf16.msra.mxu0 0
  %229 = vmatprep.subr.bf16.mxu0 0
  %230 = vmatpush2.bf16.msra.mxu0 0
  %231 = vmatprep.subr.bf16.mxu0 0
  %232 = vmatpush2.bf16.msra.mxu0 0
  %233 = vmatprep.subr.bf16.mxu0 0
  %234 = vmatpush2.bf16.msra.mxu0 0
  %235 = vmatprep.subr.bf16.mxu0 0
  %236 = vmatpush2.bf16.msra.mxu0 0
  %237 = vmatprep.mubr.bf16.mxu0 0
  %238 = vmatmul.mubr.bf16.gmra.mxu0 %v197
  %v239 = vpop.f32.mrf.mxu0
  %v240 = vadd.f32 %v170, %v239
  %v241 = vpop.f32.mrf.mxu0
  %v242 = vpop.f32.mrf.mxu0
  %v243 = vadd.f32 %v170, %v242
  %v244 = vpop.f32.mrf.mxu0
  %245 = vmatprep.mubr.bf16.mxu0 0
  %246 = vmatmul.mubr.bf16.gmra.mxu0 %v200
  %v247 = vpop.f32.mrf.mxu0
  %v248 = vadd.f32 %v170, %v247
  %v249 = vpop.f32.mrf.mxu0
  %v250 = vpop.f32.mrf.mxu0
  %v251 = vadd.f32 %v170, %v250
  %v252 = vpop.f32.mrf.mxu0
  %253 = vmatprep.mubr.bf16.mxu0 0
  %254 = vmatmul.mubr.bf16.gmra.mxu0 %v203
  %v255 = vpop.f32.mrf.mxu0
  %v256 = vadd.f32 %v170, %v255
  %v257 = vpop.f32.mrf.mxu0
  %v258 = vpop.f32.mrf.mxu0
  %v259 = vadd.f32 %v170, %v258
  %v260 = vpop.f32.mrf.mxu0
  %261 = vdwg.mxu0
  %v262 = vpack.c.bf16 %v243, %v240
  %v263 = vpack.c.bf16 %v251, %v248
  %v264 = vpack.c.bf16 %v259, %v256
  %v268 = vunpack.c.l.b16 %v262
  %v269 = vunpack.c.h.b16 %v262
  %v270 = vunpack.c.l.b16 %v263
  %v271 = vunpack.c.h.b16 %v263
  %v272 = vunpack.c.l.b16 %v264
  %v273 = vunpack.c.h.b16 %v264
  %v274 = vpack.c.b16 %v268, %v268
  %v275 = vpack.c.b16 %v269, %v269
  %v276 = vpack.c.b16 %v270, %v270
  %v277 = vpack.c.b16 %v271, %v271
  %v278 = vpack.c.b16 %v272, %v272
  %v279 = vpack.c.b16 %v273, %v273
  %vm286 = vcmask 519168
  %287 = vst.msk [vmem:[%s5] sm:$0xf] %vm286, %v274
  %288 = vst.msk [vmem:[%s5 + $0x4] sm:$0xf] %vm286, %v275
  %289 = vst.msk [vmem:[%s5 + $0x8] sm:$0xf] %vm286, %v276
  %290 = vst.msk [vmem:[%s5 + $0xc] sm:$0xf] %vm286, %v277
  %291 = vst.msk [vmem:[%s5 + $0x10] sm:$0xf] %vm286, %v278
  %292 = vst.msk [vmem:[%s5 + $0x14] sm:$0xf] %vm286, %v279
  // Predicated region
  $region22: #{gmn_conv_forward.3} parent=0 // pred_check
    _
  $region23: #{gmn_conv_forward.3} parent=0 // pred_check_branch
    %294 = sbr.rel (0) target = $region25
  $region24: #{gmn_conv_forward.3} parent=0 // pred_region
    _
  $region25: #{gmn_conv_forward.3} parent=0 // pred_fallthru
    _
  // Predicated region
  $region26: #{gmn_conv_forward.3} parent=0 // pred_check
    _
  $region27: #{gmn_conv_forward.3} parent=0 // pred_check_branch
    %296 = sbr.rel (0) target = $region29
  $region28: #{gmn_conv_forward.3} parent=0 // pred_region
    _
  $region29: #{gmn_conv_forward.3} parent=0 // pred_fallthru
    _

// kernel: gmn_conv_forward.4
$region0: #{gmn_conv_forward.4}
  #allocation0 [shape = 'u32[]', space=smem, size = 0x4, offset = 0x4, fixed_abs, tag = 'smem constant byte address 0x4 - core index']
  #allocation1 [shape = 'u32[144,128]{1,0:T(1,128)}', space=vmem, size = 0x12000, scoped, tag = 'internal scratch']
  #allocation2 [shape = 'f32[40,128]{1,0:T(8,128)}', space=vmem, size = 0x5000, scoped, tag = 'scratch operand']
  #allocation3 [shape = 'f32[1,128]{1,0:T(1,128)}', space=vmem, size = 0x200, scoped, tag = 'scratch operand']
  %s0 = inlined_call_operand.vmem [shape: f32[40,128], index: 0, kind: input, shape index: {}]
  %s1 = inlined_call_operand.vmem [shape: s32[128,1], index: 1, kind: input, shape index: {}]
  %s2 = inlined_call_operand.vmem [shape: f32[32,128], index: 2, kind: input, shape index: {}]
  %s3 = inlined_call_operand.vmem [shape: s32[1,128], index: 3, kind: input, shape index: {}]
  %s4 = inlined_call_operand.vmem [shape: f32[32,128], index: 4, kind: output, shape index: {0}]
  %s5 = inlined_call_operand.vmem [shape: f32[32,128], index: 5, kind: output, shape index: {1}]
  %6 = xla_tuple %s4, %s5
  %s7 = sld [smem:[#allocation0]]
  $region42: #{gmn_conv_forward.4} parent=0
    _
  %s9 = ssub.s32 1, %s7
  %s10 = scalar_select 0, %s9, %s7
  // Predicated region
  $region2: #{gmn_conv_forward.4} parent=0 // pred_check
    _
  $region3: #{gmn_conv_forward.4} parent=0 // pred_check_branch
    %12 = sbr.rel (0) target = $region5
  $region4: #{gmn_conv_forward.4} parent=0 // pred_region
    _
  $region5: #{gmn_conv_forward.4} parent=0 // pred_fallthru
    _
  // Predicated region
  $region6: #{gmn_conv_forward.4} parent=0 // pred_check
    _
  $region7: #{gmn_conv_forward.4} parent=0 // pred_check_branch
    %14 = sbr.rel (0) target = $region9
  $region8: #{gmn_conv_forward.4} parent=0 // pred_region
    _
  $region9: #{gmn_conv_forward.4} parent=0 // pred_fallthru
    _
  // Predicated region
  $region10: #{gmn_conv_forward.4} parent=0 // pred_check
    _
  $region11: #{gmn_conv_forward.4} parent=0 // pred_check_branch
    %16 = sbr.rel (0) target = $region13
  $region12: #{gmn_conv_forward.4} parent=0 // pred_region
    _
  $region13: #{gmn_conv_forward.4} parent=0 // pred_fallthru
    _
  // Predicated region
  $region14: #{gmn_conv_forward.4} parent=0 // pred_check
    _
  $region15: #{gmn_conv_forward.4} parent=0 // pred_check_branch
    %18 = sbr.rel (0) target = $region17
  $region16: #{gmn_conv_forward.4} parent=0 // pred_region
    _
  $region17: #{gmn_conv_forward.4} parent=0 // pred_fallthru
    _
  %p20 = scmp.eq.s32.totalorder 0, 0
  // Predicated region
  $region18: #{gmn_conv_forward.4} parent=0 // pred_check
    %p21 = pneg %p20
  $region19: #{gmn_conv_forward.4} parent=0 // pred_check_branch
    %23 = sbr.rel (%p21) target = $region21
  $region20: #{gmn_conv_forward.4} parent=0 // pred_region
    %24 = vst [vmem:[#allocation2] sm:$0xff] 0.0
    %25 = vst [vmem:[#allocation2 + $0x8] sm:$0xff] 0.0
    %26 = vst [vmem:[#allocation2 + $0x10] sm:$0xff] 0.0
    %27 = vst [vmem:[#allocation2 + $0x18] sm:$0xff] 0.0
    %28 = vst [vmem:[#allocation2 + $0x20] sm:$0xff] 0.0
    %29 = vst [vmem:[#allocation3] sm:$0x1] -1e+30
  $region21: #{gmn_conv_forward.4} parent=0 // pred_fallthru
    _
  %v30 = vld [vmem:[%s0] sm:$0xff]
  %v31 = vld [vmem:[%s0 + $0x8] sm:$0xff]
  %v32 = vld [vmem:[%s0 + $0x10] sm:$0xff]
  %v33 = vld [vmem:[%s0 + $0x18] sm:$0xff]
  %v34 = vld [vmem:[%s0 + $0x20] sm:$0xff]
  %v35 = vld [vmem:[%s2] sm:$0xff]
  %v36 = vld [vmem:[%s2 + $0x8] sm:$0xff]
  %v37 = vld [vmem:[%s2 + $0x10] sm:$0xff]
  %v38 = vld [vmem:[%s2 + $0x18] sm:$0xff]
  %v39 = vpack.c.bf16 %v31, %v30
  %v40 = vpack.c.bf16 %v33, %v32
  %v41 = vpack.c.bf16 %v34, %v34
  %v42 = vpack.c.bf16 %v36, %v35
  %v43 = vpack.c.bf16 %v38, %v37
  %44 = vxpose.xlu0.c.b16.start [1/8] %v39, 128
  %45 = vxpose.xlu0.c.b16.cont [2/8] %v40, 128
  %46 = vxpose.xlu0.c.b16.cont [3/8] 0, 128
  %47 = vxpose.xlu0.c.b16.cont [4/8] 0, 128
  %48 = vxpose.xlu0.c.b16.cont [5/8] 0, 128
  %49 = vxpose.xlu0.c.b16.cont [6/8] 0, 128
  %50 = vxpose.xlu0.c.b16.cont [7/8] 0, 128
  %51 = vxpose.xlu0.c.b16.end [8/8] 0, 128
  %v52 = vpop.trf.xlu0
  %v53 = vpop.trf.xlu0
  %v54 = vpop.trf.xlu0
  %v55 = vpop.trf.xlu0
  %v56 = vpop.trf.xlu0
  %v57 = vpop.trf.xlu0
  %v58 = vpop.trf.xlu0
  %v59 = vpop.trf.xlu0
  %vm60 = vcmask 261120
  %v62 = vsel %vm60, %v52, 0
  %v65 = vsel %vm60, %v53, 0
  %v68 = vsel %vm60, %v54, 0
  %v71 = vsel %vm60, %v55, 0
  %v74 = vsel %vm60, %v56, 0
  %v77 = vsel %vm60, %v57, 0
  %v80 = vsel %vm60, %v58, 0
  %v83 = vsel %vm60, %v59, 0
  %85 = vmatprep.subr.bf16.mxu0 0
  %86 = vmatpush1.bf16.msra.mxu0 0
  %87 = vmatprep.subr.bf16.mxu0 0
  %88 = vmatpush1.bf16.msra.mxu0 0
  %89 = vmatprep.subr.bf16.mxu0 0
  %90 = vmatpush1.bf16.msra.mxu0 0
  %91 = vmatprep.subr.bf16.mxu0 0
  %92 = vmatpush1.bf16.msra.mxu0 0
  %93 = vmatprep.subr.bf16.mxu0 0
  %94 = vmatpush1.bf16.msra.mxu0 0
  %95 = vmatprep.subr.bf16.mxu0 0
  %96 = vmatpush1.bf16.msra.mxu0 0
  %97 = vmatprep.subr.bf16.mxu0 0
  %98 = vmatpush1.bf16.msra.mxu0 %v43
  %99 = vmatprep.subr.bf16.mxu0 0
  %100 = vmatpush1.bf16.msra.mxu0 %v42
  %101 = vmatprep.subr.bf16.mxu0 0
  %102 = vmatpush2.bf16.msra.mxu0 0
  %103 = vmatprep.subr.bf16.mxu0 0
  %104 = vmatpush2.bf16.msra.mxu0 0
  %105 = vmatprep.subr.bf16.mxu0 0
  %106 = vmatpush2.bf16.msra.mxu0 0
  %107 = vmatprep.subr.bf16.mxu0 0
  %108 = vmatpush2.bf16.msra.mxu0 0
  %109 = vmatprep.subr.bf16.mxu0 0
  %110 = vmatpush2.bf16.msra.mxu0 0
  %111 = vmatprep.subr.bf16.mxu0 0
  %112 = vmatpush2.bf16.msra.mxu0 0
  %113 = vmatprep.subr.bf16.mxu0 0
  %114 = vmatpush2.bf16.msra.mxu0 0
  %115 = vmatprep.subr.bf16.mxu0 0
  %116 = vmatpush2.bf16.msra.mxu0 0
  %117 = vmatprep.mubr.bf16.mxu0 0
  %118 = vmatmul.mubr.bf16.gmra.mxu0 %v62
  %v119 = vpop.f32.mrf.mxu0
  %v120 = vadd.f32 0.0, %v119
  %v121 = vpop.f32.mrf.mxu0
  %v122 = vpop.f32.mrf.mxu0
  %v123 = vadd.f32 0.0, %v122
  %v124 = vpop.f32.mrf.mxu0
  %125 = vmatprep.mubr.bf16.mxu0 0
  %126 = vmatmul.mubr.bf16.gmra.mxu0 %v65
  %v127 = vpop.f32.mrf.mxu0
  %v128 = vadd.f32 0.0, %v127
  %v129 = vpop.f32.mrf.mxu0
  %v130 = vpop.f32.mrf.mxu0
  %v131 = vadd.f32 0.0, %v130
  %v132 = vpop.f32.mrf.mxu0
  %133 = vmatprep.mubr.bf16.mxu0 0
  %134 = vmatmul.mubr.bf16.gmra.mxu0 %v68
  %v135 = vpop.f32.mrf.mxu0
  %v136 = vadd.f32 0.0, %v135
  %v137 = vpop.f32.mrf.mxu0
  %v138 = vpop.f32.mrf.mxu0
  %v139 = vadd.f32 0.0, %v138
  %v140 = vpop.f32.mrf.mxu0
  %141 = vmatprep.mubr.bf16.mxu0 0
  %142 = vmatmul.mubr.bf16.gmra.mxu0 %v71
  %v143 = vpop.f32.mrf.mxu0
  %v144 = vadd.f32 0.0, %v143
  %v145 = vpop.f32.mrf.mxu0
  %v146 = vpop.f32.mrf.mxu0
  %v147 = vadd.f32 0.0, %v146
  %v148 = vpop.f32.mrf.mxu0
  %149 = vmatprep.mubr.bf16.mxu0 0
  %150 = vmatmul.mubr.bf16.gmra.mxu0 %v74
  %v151 = vpop.f32.mrf.mxu0
  %v152 = vadd.f32 0.0, %v151
  %v153 = vpop.f32.mrf.mxu0
  %v154 = vpop.f32.mrf.mxu0
  %v155 = vadd.f32 0.0, %v154
  %v156 = vpop.f32.mrf.mxu0
  %157 = vmatprep.mubr.bf16.mxu0 0
  %158 = vmatmul.mubr.bf16.gmra.mxu0 %v77
  %v159 = vpop.f32.mrf.mxu0
  %v160 = vadd.f32 0.0, %v159
  %v161 = vpop.f32.mrf.mxu0
  %v162 = vpop.f32.mrf.mxu0
  %v163 = vadd.f32 0.0, %v162
  %v164 = vpop.f32.mrf.mxu0
  %165 = vmatprep.mubr.bf16.mxu0 0
  %166 = vmatmul.mubr.bf16.gmra.mxu0 %v80
  %v167 = vpop.f32.mrf.mxu0
  %v168 = vadd.f32 0.0, %v167
  %v169 = vpop.f32.mrf.mxu0
  %v170 = vpop.f32.mrf.mxu0
  %v171 = vadd.f32 0.0, %v170
  %v172 = vpop.f32.mrf.mxu0
  %173 = vmatprep.mubr.bf16.mxu0 0
  %174 = vmatmul.mubr.bf16.gmra.mxu0 %v83
  %v175 = vpop.f32.mrf.mxu0
  %v176 = vadd.f32 0.0, %v175
  %v177 = vpop.f32.mrf.mxu0
  %v178 = vpop.f32.mrf.mxu0
  %v179 = vadd.f32 0.0, %v178
  %v180 = vpop.f32.mrf.mxu0
  %181 = vdwg.mxu0
  %v182 = vld [vmem:[%s1] sm:$0xff]
  %v183 = vld [vmem:[%s1 + $0x8] sm:$0xff]
  %v184 = vld [vmem:[%s1 + $0x10] sm:$0xff]
  %v185 = vld [vmem:[%s1 + $0x18] sm:$0xff]
  %v186 = vld [vmem:[%s1 + $0x20] sm:$0xff]
  %v187 = vld [vmem:[%s1 + $0x28] sm:$0xff]
  %v188 = vld [vmem:[%s1 + $0x30] sm:$0xff]
  %v189 = vld [vmem:[%s1 + $0x38] sm:$0xff]
  %v190 = vld [vmem:[%s1 + $0x40] sm:$0xff]
  %v191 = vld [vmem:[%s1 + $0x48] sm:$0xff]
  %v192 = vld [vmem:[%s1 + $0x50] sm:$0xff]
  %v193 = vld [vmem:[%s1 + $0x58] sm:$0xff]
  %v194 = vld [vmem:[%s1 + $0x60] sm:$0xff]
  %v195 = vld [vmem:[%s1 + $0x68] sm:$0xff]
  %v196 = vld [vmem:[%s1 + $0x70] sm:$0xff]
  %v197 = vld [vmem:[%s1 + $0x78] sm:$0xff]
  %v198 = vld [vmem:[%s3] sm:$0x1]
  %199 = vset.pattern.permute.xlu0 0
  %200 = vperm.xlu0 %199, %v182
  %v201 = vpop.permute.xlu0 %200
  %202 = vset.pattern.permute.xlu0 0
  %203 = vperm.xlu0 %202, %v183
  %v204 = vpop.permute.xlu0 %203
  %205 = vset.pattern.permute.xlu0 0
  %206 = vperm.xlu0 %205, %v184
  %v207 = vpop.permute.xlu0 %206
  %208 = vset.pattern.permute.xlu0 0
  %209 = vperm.xlu0 %208, %v185
  %v210 = vpop.permute.xlu0 %209
  %211 = vset.pattern.permute.xlu0 0
  %212 = vperm.xlu0 %211, %v186
  %v213 = vpop.permute.xlu0 %212
  %214 = vset.pattern.permute.xlu0 0
  %215 = vperm.xlu0 %214, %v187
  %v216 = vpop.permute.xlu0 %215
  %217 = vset.pattern.permute.xlu0 0
  %218 = vperm.xlu0 %217, %v188
  %v219 = vpop.permute.xlu0 %218
  %220 = vset.pattern.permute.xlu0 0
  %221 = vperm.xlu0 %220, %v189
  %v222 = vpop.permute.xlu0 %221
  %223 = vset.pattern.permute.xlu0 0
  %224 = vperm.xlu0 %223, %v190
  %v225 = vpop.permute.xlu0 %224
  %226 = vset.pattern.permute.xlu0 0
  %227 = vperm.xlu0 %226, %v191
  %v228 = vpop.permute.xlu0 %227
  %229 = vset.pattern.permute.xlu0 0
  %230 = vperm.xlu0 %229, %v192
  %v231 = vpop.permute.xlu0 %230
  %232 = vset.pattern.permute.xlu0 0
  %233 = vperm.xlu0 %232, %v193
  %v234 = vpop.permute.xlu0 %233
  %235 = vset.pattern.permute.xlu0 0
  %236 = vperm.xlu0 %235, %v194
  %v237 = vpop.permute.xlu0 %236
  %238 = vset.pattern.permute.xlu0 0
  %239 = vperm.xlu0 %238, %v195
  %v240 = vpop.permute.xlu0 %239
  %241 = vset.pattern.permute.xlu0 0
  %242 = vperm.xlu0 %241, %v196
  %v243 = vpop.permute.xlu0 %242
  %244 = vset.pattern.permute.xlu0 0
  %245 = vperm.xlu0 %244, %v197
  %v246 = vpop.permute.xlu0 %245
  %v247 = vlaneseq
  %v248 = vshrl.u32 %v247, 7
  %v249 = vsub.s32 0, %v248
  %v250 = vrot.slane %v198, %v249
  %vm251 = vcmp.eq.s32.totalorder %v201, %v250
  %vm252 = vcmp.eq.s32.totalorder %v204, %v250
  %vm253 = vcmp.eq.s32.totalorder %v207, %v250
  %vm254 = vcmp.eq.s32.totalorder %v210, %v250
  %vm255 = vcmp.eq.s32.totalorder %v213, %v250
  %vm256 = vcmp.eq.s32.totalorder %v216, %v250
  %vm257 = vcmp.eq.s32.totalorder %v219, %v250
  %vm258 = vcmp.eq.s32.totalorder %v222, %v250
  %vm259 = vcmp.eq.s32.totalorder %v225, %v250
  %vm260 = vcmp.eq.s32.totalorder %v228, %v250
  %vm261 = vcmp.eq.s32.totalorder %v231, %v250
  %vm262 = vcmp.eq.s32.totalorder %v234, %v250
  %vm263 = vcmp.eq.s32.totalorder %v237, %v250
  %vm264 = vcmp.eq.s32.totalorder %v240, %v250
  %vm265 = vcmp.eq.s32.totalorder %v243, %v250
  %vm266 = vcmp.eq.s32.totalorder %v246, %v250
  %v267 = vsel %vm251, %v120, -1e+30
  %v268 = vsel %vm252, %v123, -1e+30
  %v269 = vsel %vm253, %v128, -1e+30
  %v270 = vsel %vm254, %v131, -1e+30
  %v271 = vsel %vm255, %v136, -1e+30
  %v272 = vsel %vm256, %v139, -1e+30
  %v273 = vsel %vm257, %v144, -1e+30
  %v274 = vsel %vm258, %v147, -1e+30
  %v275 = vsel %vm259, %v152, -1e+30
  %v276 = vsel %vm260, %v155, -1e+30
  %v277 = vsel %vm261, %v160, -1e+30
  %v278 = vsel %vm262, %v163, -1e+30
  %v279 = vsel %vm263, %v168, -1e+30
  %v280 = vsel %vm264, %v171, -1e+30
  %v281 = vsel %vm265, %v176, -1e+30
  %v282 = vsel %vm266, %v179, -1e+30
  %283 = vmax.xlane.f32.xlu0 %v267
  %v284 = vpop.xlane.xlu0 %283
  %285 = vmax.xlane.f32.xlu0 %v268
  %v286 = vpop.xlane.xlu0 %285
  %287 = vmax.xlane.f32.xlu0 %v269
  %v288 = vpop.xlane.xlu0 %287
  %289 = vmax.xlane.f32.xlu0 %v270
  %v290 = vpop.xlane.xlu0 %289
  %291 = vmax.xlane.f32.xlu0 %v271
  %v292 = vpop.xlane.xlu0 %291
  %293 = vmax.xlane.f32.xlu0 %v272
  %v294 = vpop.xlane.xlu0 %293
  %295 = vmax.xlane.f32.xlu0 %v273
  %v296 = vpop.xlane.xlu0 %295
  %297 = vmax.xlane.f32.xlu0 %v274
  %v298 = vpop.xlane.xlu0 %297
  %299 = vmax.xlane.f32.xlu0 %v275
  %v300 = vpop.xlane.xlu0 %299
  %301 = vmax.xlane.f32.xlu0 %v276
  %v302 = vpop.xlane.xlu0 %301
  %303 = vmax.xlane.f32.xlu0 %v277
  %v304 = vpop.xlane.xlu0 %303
  %305 = vmax.xlane.f32.xlu0 %v278
  %v306 = vpop.xlane.xlu0 %305
  %307 = vmax.xlane.f32.xlu0 %v279
  %v308 = vpop.xlane.xlu0 %307
  %309 = vmax.xlane.f32.xlu0 %v280
  %v310 = vpop.xlane.xlu0 %309
  %311 = vmax.xlane.f32.xlu0 %v281
  %v312 = vpop.xlane.xlu0 %311
  %313 = vmax.xlane.f32.xlu0 %v282
  %v314 = vpop.xlane.xlu0 %313
  %v315 = vsub.f32 %v267, %v284
  %v316 = vsub.f32 %v268, %v286
  %v317 = vsub.f32 %v269, %v288
  %v318 = vsub.f32 %v270, %v290
  %v319 = vsub.f32 %v271, %v292
  %v320 = vsub.f32 %v272, %v294
  %v321 = vsub.f32 %v273, %v296
  %v322 = vsub.f32 %v274, %v298
  %v323 = vsub.f32 %v275, %v300
  %v324 = vsub.f32 %v276, %v302
  %v325 = vsub.f32 %v277, %v304
  %v326 = vsub.f32 %v278, %v306
  %v327 = vsub.f32 %v279, %v308
  %v328 = vsub.f32 %v280, %v310
  %v329 = vsub.f32 %v281, %v312
  %v330 = vsub.f32 %v282, %v314
  %v331 = vmul.f32 %v315, 1.442695
  %v332 = vpow.pop %v331
  %v333 = vmul.f32 %v316, 1.442695
  %v334 = vpow.pop %v333
  %v335 = vmul.f32 %v317, 1.442695
  %v336 = vpow.pop %v335
  %v337 = vmul.f32 %v318, 1.442695
  %v338 = vpow.pop %v337
  %v339 = vmul.f32 %v319, 1.442695
  %v340 = vpow.pop %v339
  %v341 = vmul.f32 %v320, 1.442695
  %v342 = vpow.pop %v341
  %v343 = vmul.f32 %v321, 1.442695
  %v344 = vpow.pop %v343
  %v345 = vmul.f32 %v322, 1.442695
  %v346 = vpow.pop %v345
  %v347 = vmul.f32 %v323, 1.442695
  %v348 = vpow.pop %v347
  %v349 = vmul.f32 %v324, 1.442695
  %v350 = vpow.pop %v349
  %v351 = vmul.f32 %v325, 1.442695
  %v352 = vpow.pop %v351
  %v353 = vmul.f32 %v326, 1.442695
  %v354 = vpow.pop %v353
  %v355 = vmul.f32 %v327, 1.442695
  %v356 = vpow.pop %v355
  %v357 = vmul.f32 %v328, 1.442695
  %v358 = vpow.pop %v357
  %v359 = vmul.f32 %v329, 1.442695
  %v360 = vpow.pop %v359
  %v361 = vmul.f32 %v330, 1.442695
  %v362 = vpow.pop %v361
  %v363 = vsel %vm251, %v332, 0.0
  %v364 = vsel %vm252, %v334, 0.0
  %v365 = vsel %vm253, %v336, 0.0
  %v366 = vsel %vm254, %v338, 0.0
  %v367 = vsel %vm255, %v340, 0.0
  %v368 = vsel %vm256, %v342, 0.0
  %v369 = vsel %vm257, %v344, 0.0
  %v370 = vsel %vm258, %v346, 0.0
  %v371 = vsel %vm259, %v348, 0.0
  %v372 = vsel %vm260, %v350, 0.0
  %v373 = vsel %vm261, %v352, 0.0
  %v374 = vsel %vm262, %v354, 0.0
  %v375 = vsel %vm263, %v356, 0.0
  %v376 = vsel %vm264, %v358, 0.0
  %v377 = vsel %vm265, %v360, 0.0
  %v378 = vsel %vm266, %v362, 0.0
  %379 = vadd.xlane.f32.xlu0 %v363
  %v380 = vpop.xlane.xlu0 %379
  %381 = vadd.xlane.f32.xlu0 %v364
  %v382 = vpop.xlane.xlu0 %381
  %383 = vadd.xlane.f32.xlu0 %v365
  %v384 = vpop.xlane.xlu0 %383
  %385 = vadd.xlane.f32.xlu0 %v366
  %v386 = vpop.xlane.xlu0 %385
  %387 = vadd.xlane.f32.xlu0 %v367
  %v388 = vpop.xlane.xlu0 %387
  %389 = vadd.xlane.f32.xlu0 %v368
  %v390 = vpop.xlane.xlu0 %389
  %391 = vadd.xlane.f32.xlu0 %v369
  %v392 = vpop.xlane.xlu0 %391
  %393 = vadd.xlane.f32.xlu0 %v370
  %v394 = vpop.xlane.xlu0 %393
  %395 = vadd.xlane.f32.xlu0 %v371
  %v396 = vpop.xlane.xlu0 %395
  %397 = vadd.xlane.f32.xlu0 %v372
  %v398 = vpop.xlane.xlu0 %397
  %399 = vadd.xlane.f32.xlu0 %v373
  %v400 = vpop.xlane.xlu0 %399
  %401 = vadd.xlane.f32.xlu0 %v374
  %v402 = vpop.xlane.xlu0 %401
  %403 = vadd.xlane.f32.xlu0 %v375
  %v404 = vpop.xlane.xlu0 %403
  %405 = vadd.xlane.f32.xlu0 %v376
  %v406 = vpop.xlane.xlu0 %405
  %407 = vadd.xlane.f32.xlu0 %v377
  %v408 = vpop.xlane.xlu0 %407
  %409 = vadd.xlane.f32.xlu0 %v378
  %v410 = vpop.xlane.xlu0 %409
  %vm411 = vcmp.gt.f32.partialorder %v380, 0.0
  %vm412 = vcmp.gt.f32.partialorder %v382, 0.0
  %vm413 = vcmp.gt.f32.partialorder %v384, 0.0
  %vm414 = vcmp.gt.f32.partialorder %v386, 0.0
  %vm415 = vcmp.gt.f32.partialorder %v388, 0.0
  %vm416 = vcmp.gt.f32.partialorder %v390, 0.0
  %vm417 = vcmp.gt.f32.partialorder %v392, 0.0
  %vm418 = vcmp.gt.f32.partialorder %v394, 0.0
  %vm419 = vcmp.gt.f32.partialorder %v396, 0.0
  %vm420 = vcmp.gt.f32.partialorder %v398, 0.0
  %vm421 = vcmp.gt.f32.partialorder %v400, 0.0
  %vm422 = vcmp.gt.f32.partialorder %v402, 0.0
  %vm423 = vcmp.gt.f32.partialorder %v404, 0.0
  %vm424 = vcmp.gt.f32.partialorder %v406, 0.0
  %vm425 = vcmp.gt.f32.partialorder %v408, 0.0
  %vm426 = vcmp.gt.f32.partialorder %v410, 0.0
  %v427 = vsel %vm411, %v380, 1.0
  %v428 = vsel %vm412, %v382, 1.0
  %v429 = vsel %vm413, %v384, 1.0
  %v430 = vsel %vm414, %v386, 1.0
  %v431 = vsel %vm415, %v388, 1.0
  %v432 = vsel %vm416, %v390, 1.0
  %v433 = vsel %vm417, %v392, 1.0
  %v434 = vsel %vm418, %v394, 1.0
  %v435 = vsel %vm419, %v396, 1.0
  %v436 = vsel %vm420, %v398, 1.0
  %v437 = vsel %vm421, %v400, 1.0
  %v438 = vsel %vm422, %v402, 1.0
  %v439 = vsel %vm423, %v404, 1.0
  %v440 = vsel %vm424, %v406, 1.0
  %v441 = vsel %vm425, %v408, 1.0
  %v442 = vsel %vm426, %v410, 1.0
  %v443 = vrcp.pop %v427
  %v444 = vrcp.pop %v428
  %v445 = vrcp.pop %v429
  %v446 = vrcp.pop %v430
  %v447 = vrcp.pop %v431
  %v448 = vrcp.pop %v432
  %v449 = vrcp.pop %v433
  %v450 = vrcp.pop %v434
  %v451 = vrcp.pop %v435
  %v452 = vrcp.pop %v436
  %v453 = vrcp.pop %v437
  %v454 = vrcp.pop %v438
  %v455 = vrcp.pop %v439
  %v456 = vrcp.pop %v440
  %v457 = vrcp.pop %v441
  %v458 = vrcp.pop %v442
  %v459 = vmul.f32 %v363, %v443
  %v460 = vmul.f32 %v364, %v444
  %v461 = vmul.f32 %v365, %v445
  %v462 = vmul.f32 %v366, %v446
  %v463 = vmul.f32 %v367, %v447
  %v464 = vmul.f32 %v368, %v448
  %v465 = vmul.f32 %v369, %v449
  %v466 = vmul.f32 %v370, %v450
  %v467 = vmul.f32 %v371, %v451
  %v468 = vmul.f32 %v372, %v452
  %v469 = vmul.f32 %v373, %v453
  %v470 = vmul.f32 %v374, %v454
  %v471 = vmul.f32 %v375, %v455
  %v472 = vmul.f32 %v376, %v456
  %v473 = vmul.f32 %v377, %v457
  %v474 = vmul.f32 %v378, %v458
  %v475 = vpack.c.bf16 %v460, %v459
  %v476 = vpack.c.bf16 %v462, %v461
  %v477 = vpack.c.bf16 %v464, %v463
  %v478 = vpack.c.bf16 %v466, %v465
  %v479 = vpack.c.bf16 %v468, %v467
  %v480 = vpack.c.bf16 %v470, %v469
  %v481 = vpack.c.bf16 %v472, %v471
  %v482 = vpack.c.bf16 %v474, %v473
  %483 = vmatprep.subr.bf16.mxu0 0
  %484 = vmatpush1.bf16.xpose.msra.mxu0 %v482
  %485 = vmatprep.subr.bf16.mxu0 0
  %486 = vmatpush1.bf16.xpose.msra.mxu0 %v481
  %487 = vmatprep.subr.bf16.mxu0 0
  %488 = vmatpush1.bf16.xpose.msra.mxu0 %v480
  %489 = vmatprep.subr.bf16.mxu0 0
  %490 = vmatpush1.bf16.xpose.msra.mxu0 %v479
  %491 = vmatprep.subr.bf16.mxu0 0
  %492 = vmatpush1.bf16.xpose.msra.mxu0 %v478
  %493 = vmatprep.subr.bf16.mxu0 0
  %494 = vmatpush1.bf16.xpose.msra.mxu0 %v477
  %495 = vmatprep.subr.bf16.mxu0 0
  %496 = vmatpush1.bf16.xpose.msra.mxu0 %v476
  %497 = vmatprep.subr.bf16.mxu0 0
  %498 = vmatpush1.bf16.xpose.msra.mxu0 %v475
  %499 = vmatprep.subr.bf16.mxu0 0
  %500 = vmatpush2.bf16.xpose.msra.mxu0 0
  %501 = vmatprep.subr.bf16.mxu0 0
  %502 = vmatpush2.bf16.xpose.msra.mxu0 0
  %503 = vmatprep.subr.bf16.mxu0 0
  %504 = vmatpush2.bf16.xpose.msra.mxu0 0
  %505 = vmatprep.subr.bf16.mxu0 0
  %506 = vmatpush2.bf16.xpose.msra.mxu0 0
  %507 = vmatprep.subr.bf16.mxu0 0
  %508 = vmatpush2.bf16.xpose.msra.mxu0 0
  %509 = vmatprep.subr.bf16.mxu0 0
  %510 = vmatpush2.bf16.xpose.msra.mxu0 0
  %511 = vmatprep.subr.bf16.mxu0 0
  %512 = vmatpush2.bf16.xpose.msra.mxu0 0
  %513 = vmatprep.subr.bf16.mxu0 0
  %514 = vmatpush2.bf16.xpose.msra.mxu0 0
  %515 = vmatprep.mubr.bf16.mxu0 0
  %516 = vmatmul.mubr.bf16.gmra.mxu0 %v42
  %v517 = vpop.f32.mrf.mxu0
  %v518 = vadd.f32 0.0, %v517
  %v519 = vpop.f32.mrf.mxu0
  %v520 = vpop.f32.mrf.mxu0
  %v521 = vadd.f32 0.0, %v520
  %v522 = vpop.f32.mrf.mxu0
  %523 = vmatprep.mubr.bf16.mxu0 0
  %524 = vmatmul.mubr.bf16.gmra.mxu0 %v43
  %v525 = vpop.f32.mrf.mxu0
  %v526 = vadd.f32 0.0, %v525
  %v527 = vpop.f32.mrf.mxu0
  %v528 = vpop.f32.mrf.mxu0
  %v529 = vadd.f32 0.0, %v528
  %v530 = vpop.f32.mrf.mxu0
  %531 = vdwg.mxu0
  %v532 = vsub.f32 %v30, %v518
  %v533 = vsub.f32 %v31, %v521
  %v534 = vsub.f32 %v32, %v526
  %v535 = vsub.f32 %v33, %v529
  %536 = vst [vmem:[%s4] sm:$0xff] %v532
  %537 = vst [vmem:[%s4 + $0x8] sm:$0xff] %v533
  %538 = vst [vmem:[%s4 + $0x10] sm:$0xff] %v534
  %539 = vst [vmem:[%s4 + $0x18] sm:$0xff] %v535
  %v540 = vld [vmem:[#allocation3] sm:$0x1]
  %v541 = vmax.f32 %v267, %v271
  %v542 = vmax.f32 %v268, %v272
  %v543 = vmax.f32 %v269, %v273
  %v544 = vmax.f32 %v270, %v274
  %v545 = vmax.f32 %v541, %v275
  %v546 = vmax.f32 %v542, %v276
  %v547 = vmax.f32 %v543, %v277
  %v548 = vmax.f32 %v544, %v278
  %v549 = vmax.f32 %v545, %v279
  %v550 = vmax.f32 %v546, %v280
  %v551 = vmax.f32 %v547, %v281
  %v552 = vmax.f32 %v548, %v282
  %v553 = vmax.f32 %v549, %v550
  %v554 = vmax.f32 %v551, %v552
  %v555 = vmax.f32 %v553, %v554
  %v556 = vrot.slane %v555, 4
  %v557 = vmax.f32 %v555, %v556
  %v558 = vrot.slane %v557, 2
  %v559 = vmax.f32 %v557, %v558
  %v560 = vrot.slane %v559, 1
  %v561 = vmax.f32 %v559, %v560
  %v562 = vmax.f32 %v540, %v561
  %v564 = vlaneseq
  %v565 = vshrl.u32 %v564, 7
  %v566 = vsub.s32 0, %v565
  %v567 = vrot.slane %v562, %v566
  %v569 = vsub.f32 %v267, %v567
  %v570 = vsub.f32 %v268, %v567
  %v571 = vsub.f32 %v269, %v567
  %v572 = vsub.f32 %v270, %v567
  %v573 = vsub.f32 %v271, %v567
  %v574 = vsub.f32 %v272, %v567
  %v575 = vsub.f32 %v273, %v567
  %v576 = vsub.f32 %v274, %v567
  %v577 = vsub.f32 %v275, %v567
  %v578 = vsub.f32 %v276, %v567
  %v579 = vsub.f32 %v277, %v567
  %v580 = vsub.f32 %v278, %v567
  %v581 = vsub.f32 %v279, %v567
  %v582 = vsub.f32 %v280, %v567
  %v583 = vsub.f32 %v281, %v567
  %v584 = vsub.f32 %v282, %v567
  %v585 = vmul.f32 %v569, 1.442695
  %v586 = vpow.pop %v585
  %v587 = vmul.f32 %v570, 1.442695
  %v588 = vpow.pop %v587
  %v589 = vmul.f32 %v571, 1.442695
  %v590 = vpow.pop %v589
  %v591 = vmul.f32 %v572, 1.442695
  %v592 = vpow.pop %v591
  %v593 = vmul.f32 %v573, 1.442695
  %v594 = vpow.pop %v593
  %v595 = vmul.f32 %v574, 1.442695
  %v596 = vpow.pop %v595
  %v597 = vmul.f32 %v575, 1.442695
  %v598 = vpow.pop %v597
  %v599 = vmul.f32 %v576, 1.442695
  %v600 = vpow.pop %v599
  %v601 = vmul.f32 %v577, 1.442695
  %v602 = vpow.pop %v601
  %v603 = vmul.f32 %v578, 1.442695
  %v604 = vpow.pop %v603
  %v605 = vmul.f32 %v579, 1.442695
  %v606 = vpow.pop %v605
  %v607 = vmul.f32 %v580, 1.442695
  %v608 = vpow.pop %v607
  %v609 = vmul.f32 %v581, 1.442695
  %v610 = vpow.pop %v609
  %v611 = vmul.f32 %v582, 1.442695
  %v612 = vpow.pop %v611
  %v613 = vmul.f32 %v583, 1.442695
  %v614 = vpow.pop %v613
  %v615 = vmul.f32 %v584, 1.442695
  %v616 = vpow.pop %v615
  %v617 = vsel %vm251, %v586, 0.0
  %v618 = vsel %vm252, %v588, 0.0
  %v619 = vsel %vm253, %v590, 0.0
  %v620 = vsel %vm254, %v592, 0.0
  %v621 = vsel %vm255, %v594, 0.0
  %v622 = vsel %vm256, %v596, 0.0
  %v623 = vsel %vm257, %v598, 0.0
  %v624 = vsel %vm258, %v600, 0.0
  %v625 = vsel %vm259, %v602, 0.0
  %v626 = vsel %vm260, %v604, 0.0
  %v627 = vsel %vm261, %v606, 0.0
  %v628 = vsel %vm262, %v608, 0.0
  %v629 = vsel %vm263, %v610, 0.0
  %v630 = vsel %vm264, %v612, 0.0
  %v631 = vsel %vm265, %v614, 0.0
  %v632 = vsel %vm266, %v616, 0.0
  %v633 = vsub.f32 %v540, %v562
  %v634 = vmul.f32 %v633, 1.442695
  %v635 = vpow.pop %v634
  %v636 = vld [vmem:[#allocation2] sm:$0xff]
  %v637 = vld [vmem:[#allocation2 + $0x8] sm:$0xff]
  %v638 = vld [vmem:[#allocation2 + $0x10] sm:$0xff]
  %v639 = vld [vmem:[#allocation2 + $0x18] sm:$0xff]
  %v640 = vld [vmem:[#allocation2 + $0x20] sm:$0xff]
  %v642 = vlaneseq
  %v643 = vshrl.u32 %v642, 7
  %v644 = vsub.s32 0, %v643
  %v645 = vrot.slane %v635, %v644
  %v647 = vmul.f32 %v636, %v645
  %v648 = vmul.f32 %v637, %v645
  %v649 = vmul.f32 %v638, %v645
  %v650 = vmul.f32 %v639, %v645
  %v651 = vmul.f32 %v640, %v645
  %v652 = vpack.c.bf16 %v618, %v617
  %v653 = vpack.c.bf16 %v620, %v619
  %v654 = vpack.c.bf16 %v622, %v621
  %v655 = vpack.c.bf16 %v624, %v623
  %v656 = vpack.c.bf16 %v626, %v625
  %v657 = vpack.c.bf16 %v628, %v627
  %v658 = vpack.c.bf16 %v630, %v629
  %v659 = vpack.c.bf16 %v632, %v631
  %660 = vmatprep.subr.bf16.mxu0 0
  %661 = vmatpush1.bf16.msra.mxu0 %v659
  %662 = vmatprep.subr.bf16.mxu0 0
  %663 = vmatpush1.bf16.msra.mxu0 %v658
  %664 = vmatprep.subr.bf16.mxu0 0
  %665 = vmatpush1.bf16.msra.mxu0 %v657
  %666 = vmatprep.subr.bf16.mxu0 0
  %667 = vmatpush1.bf16.msra.mxu0 %v656
  %668 = vmatprep.subr.bf16.mxu0 0
  %669 = vmatpush1.bf16.msra.mxu0 %v655
  %670 = vmatprep.subr.bf16.mxu0 0
  %671 = vmatpush1.bf16.msra.mxu0 %v654
  %672 = vmatprep.subr.bf16.mxu0 0
  %673 = vmatpush1.bf16.msra.mxu0 %v653
  %674 = vmatprep.subr.bf16.mxu0 0
  %675 = vmatpush1.bf16.msra.mxu0 %v652
  %676 = vmatprep.subr.bf16.mxu0 0
  %677 = vmatpush2.bf16.msra.mxu0 0
  %678 = vmatprep.subr.bf16.mxu0 0
  %679 = vmatpush2.bf16.msra.mxu0 0
  %680 = vmatprep.subr.bf16.mxu0 0
  %681 = vmatpush2.bf16.msra.mxu0 0
  %682 = vmatprep.subr.bf16.mxu0 0
  %683 = vmatpush2.bf16.msra.mxu0 0
  %684 = vmatprep.subr.bf16.mxu0 0
  %685 = vmatpush2.bf16.msra.mxu0 0
  %686 = vmatprep.subr.bf16.mxu0 0
  %687 = vmatpush2.bf16.msra.mxu0 0
  %688 = vmatprep.subr.bf16.mxu0 0
  %689 = vmatpush2.bf16.msra.mxu0 0
  %690 = vmatprep.subr.bf16.mxu0 0
  %691 = vmatpush2.bf16.msra.mxu0 0
  %692 = vmatprep.mubr.bf16.mxu0 0
  %693 = vmatmul.mubr.bf16.gmra.mxu0 %v39
  %v694 = vpop.f32.mrf.mxu0
  %v695 = vadd.f32 0.0, %v694
  %v696 = vpop.f32.mrf.mxu0
  %v697 = vpop.f32.mrf.mxu0
  %v698 = vadd.f32 0.0, %v697
  %v699 = vpop.f32.mrf.mxu0
  %700 = vmatprep.mubr.bf16.mxu0 0
  %701 = vmatmul.mubr.bf16.gmra.mxu0 %v40
  %v702 = vpop.f32.mrf.mxu0
  %v703 = vadd.f32 0.0, %v702
  %v704 = vpop.f32.mrf.mxu0
  %v705 = vpop.f32.mrf.mxu0
  %v706 = vadd.f32 0.0, %v705
  %v707 = vpop.f32.mrf.mxu0
  %708 = vmatprep.mubr.bf16.mxu0 0
  %709 = vmatmul.mubr.bf16.gmra.mxu0 %v41
  %v710 = vpop.f32.mrf.mxu0
  %v711 = vadd.f32 0.0, %v710
  %v712 = vpop.f32.mrf.mxu0
  %v713 = vpop.f32.mrf.mxu0
  %v714 = vpop.f32.mrf.mxu0
  %715 = vdwg.mxu0
  %v716 = vadd.f32 %v647, %v695
  %v717 = vadd.f32 %v648, %v698
  %v718 = vadd.f32 %v649, %v703
  %v719 = vadd.f32 %v650, %v706
  %v720 = vadd.f32 %v651, %v711
  %721 = vst [vmem:[#allocation2] sm:$0xff] %v716
  %722 = vst [vmem:[#allocation2 + $0x8] sm:$0xff] %v717
  %723 = vst [vmem:[#allocation2 + $0x10] sm:$0xff] %v718
  %724 = vst [vmem:[#allocation2 + $0x18] sm:$0xff] %v719
  %725 = vst [vmem:[#allocation2 + $0x20] sm:$0xff] %v720
  %726 = vst [vmem:[#allocation3] sm:$0x1] %v562
  // Predicated region
  $region22: #{gmn_conv_forward.4} parent=0 // pred_check
    %p727 = pneg %p20
  $region23: #{gmn_conv_forward.4} parent=0 // pred_check_branch
    %729 = sbr.rel (%p727) target = $region25
  $region24: #{gmn_conv_forward.4} parent=0 // pred_region
    %v730 = vld [vmem:[#allocation2 + $0x20] sm:$0x1]
    %vm731 = vcmp.gt.f32.partialorder %v730, 0.0
    %v732 = vsel %vm731, %v730, 1.0
    %v733 = vrcp.pop %v732
    %v734 = vld [vmem:[#allocation2] sm:$0xff]
    %v735 = vld [vmem:[#allocation2 + $0x8] sm:$0xff]
    %v736 = vld [vmem:[#allocation2 + $0x10] sm:$0xff]
    %v737 = vld [vmem:[#allocation2 + $0x18] sm:$0xff]
    %v738 = vlaneseq
    %v739 = vshrl.u32 %v738, 7
    %v740 = vsub.s32 0, %v739
    %v741 = vrot.slane %v733, %v740
    %v742 = vmul.f32 %v734, %v741
    %v743 = vmul.f32 %v735, %v741
    %v744 = vmul.f32 %v736, %v741
    %v745 = vmul.f32 %v737, %v741
    %v746 = vsub.f32 %v35, %v742
    %v747 = vsub.f32 %v36, %v743
    %v748 = vsub.f32 %v37, %v744
    %v749 = vsub.f32 %v38, %v745
    %750 = vst [vmem:[%s5] sm:$0xff] %v746
    %751 = vst [vmem:[%s5 + $0x8] sm:$0xff] %v747
    %752 = vst [vmem:[%s5 + $0x10] sm:$0xff] %v748
    %753 = vst [vmem:[%s5 + $0x18] sm:$0xff] %v749
  $region25: #{gmn_conv_forward.4} parent=0 // pred_fallthru
    _
  // Predicated region
  $region26: #{gmn_conv_forward.4} parent=0 // pred_check
    _
  $region27: #{gmn_conv_forward.4} parent=0 // pred_check_branch
    %755 = sbr.rel (0) target = $region29
  $region28: #{gmn_conv_forward.4} parent=0 // pred_region
    _
  $region29: #{gmn_conv_forward.4} parent=0 // pred_fallthru
    _
  // Predicated region
  $region30: #{gmn_conv_forward.4} parent=0 // pred_check
    _
  $region31: #{gmn_conv_forward.4} parent=0 // pred_check_branch
    %757 = sbr.rel (0) target = $region33
  $region32: #{gmn_conv_forward.4} parent=0 // pred_region
    _
  $region33: #{gmn_conv_forward.4} parent=0 // pred_fallthru
    _
  // Predicated region
  $region34: #{gmn_conv_forward.4} parent=0 // pred_check
    _
  $region35: #{gmn_conv_forward.4} parent=0 // pred_check_branch
    %759 = sbr.rel (0) target = $region37
  $region36: #{gmn_conv_forward.4} parent=0 // pred_region
    _
  $region37: #{gmn_conv_forward.4} parent=0 // pred_fallthru
    _
  // Predicated region
  $region38: #{gmn_conv_forward.4} parent=0 // pred_check
    _
  $region39: #{gmn_conv_forward.4} parent=0 // pred_check_branch
    %761 = sbr.rel (0) target = $region41
  $region40: #{gmn_conv_forward.4} parent=0 // pred_region
    _
  $region41: #{gmn_conv_forward.4} parent=0 // pred_fallthru
    _

// kernel: gmn_conv_forward.5
$region0: #{gmn_conv_forward.5}
  #allocation0 [shape = 'u32[]', space=smem, size = 0x4, offset = 0x4, fixed_abs, tag = 'smem constant byte address 0x4 - core index']
  #allocation1 [shape = 'u32[144,128]{1,0:T(1,128)}', space=vmem, size = 0x12000, scoped, tag = 'internal scratch']
  #allocation2 [shape = 'f32[24,64]{1,0:T(8,128)}', space=vmem, size = 0x3000, scoped, tag = 'scratch operand']
  %s0 = inlined_call_operand.vmem [shape: s32[1,48], index: 0, kind: input, shape index: {}]
  %s1 = inlined_call_operand.vmem [shape: bf16[48,64], index: 1, kind: input, shape index: {}]
  %s2 = inlined_call_operand.vmem [shape: bf16[24,64], index: 2, kind: input, shape index: {}]
  %s3 = inlined_call_operand.vmem [shape: f32[24,32], index: 3, kind: input, shape index: {}]
  %s4 = inlined_call_operand.vmem [shape: bf16[128,64], index: 4, kind: input, shape index: {}]
  %s5 = inlined_call_operand.vmem [shape: f32[1,64], index: 5, kind: input, shape index: {}]
  %s6 = inlined_call_operand.vmem [shape: bf16[64,32], index: 6, kind: input, shape index: {}]
  %s7 = inlined_call_operand.vmem [shape: f32[1,32], index: 7, kind: input, shape index: {}]
  %s8 = inlined_call_operand.vmem [shape: bf16[32,32], index: 8, kind: input, shape index: {}]
  %s9 = inlined_call_operand.vmem [shape: f32[1,32], index: 9, kind: input, shape index: {}]
  %s10 = inlined_call_operand.vmem [shape: f32[24,32], index: 10, kind: output, shape index: {}]
  %s11 = sld [smem:[#allocation0]]
  $region58: #{gmn_conv_forward.5} parent=0
    _
  %s13 = ssub.s32 1, %s11
  %s14 = scalar_select 0, %s13, %s11
  // Predicated region
  $region2: #{gmn_conv_forward.5} parent=0 // pred_check
    _
  $region3: #{gmn_conv_forward.5} parent=0 // pred_check_branch
    %16 = sbr.rel (0) target = $region5
  $region4: #{gmn_conv_forward.5} parent=0 // pred_region
    _
  $region5: #{gmn_conv_forward.5} parent=0 // pred_fallthru
    _
  // Predicated region
  $region6: #{gmn_conv_forward.5} parent=0 // pred_check
    _
  $region7: #{gmn_conv_forward.5} parent=0 // pred_check_branch
    %18 = sbr.rel (0) target = $region9
  $region8: #{gmn_conv_forward.5} parent=0 // pred_region
    _
  $region9: #{gmn_conv_forward.5} parent=0 // pred_fallthru
    _
  // Predicated region
  $region10: #{gmn_conv_forward.5} parent=0 // pred_check
    _
  $region11: #{gmn_conv_forward.5} parent=0 // pred_check_branch
    %20 = sbr.rel (0) target = $region13
  $region12: #{gmn_conv_forward.5} parent=0 // pred_region
    _
  $region13: #{gmn_conv_forward.5} parent=0 // pred_fallthru
    _
  // Predicated region
  $region14: #{gmn_conv_forward.5} parent=0 // pred_check
    _
  $region15: #{gmn_conv_forward.5} parent=0 // pred_check_branch
    %22 = sbr.rel (0) target = $region17
  $region16: #{gmn_conv_forward.5} parent=0 // pred_region
    _
  $region17: #{gmn_conv_forward.5} parent=0 // pred_fallthru
    _
  // Predicated region
  $region18: #{gmn_conv_forward.5} parent=0 // pred_check
    _
  $region19: #{gmn_conv_forward.5} parent=0 // pred_check_branch
    %24 = sbr.rel (0) target = $region21
  $region20: #{gmn_conv_forward.5} parent=0 // pred_region
    _
  $region21: #{gmn_conv_forward.5} parent=0 // pred_fallthru
    _
  // Predicated region
  $region22: #{gmn_conv_forward.5} parent=0 // pred_check
    _
  $region23: #{gmn_conv_forward.5} parent=0 // pred_check_branch
    %26 = sbr.rel (0) target = $region25
  $region24: #{gmn_conv_forward.5} parent=0 // pred_region
    _
  $region25: #{gmn_conv_forward.5} parent=0 // pred_fallthru
    _
  // Predicated region
  $region26: #{gmn_conv_forward.5} parent=0 // pred_check
    _
  $region27: #{gmn_conv_forward.5} parent=0 // pred_check_branch
    %28 = sbr.rel (0) target = $region29
  $region28: #{gmn_conv_forward.5} parent=0 // pred_region
    _
  $region29: #{gmn_conv_forward.5} parent=0 // pred_fallthru
    _
  // Predicated region
  $region30: #{gmn_conv_forward.5} parent=0 // pred_check
    _
  $region31: #{gmn_conv_forward.5} parent=0 // pred_check_branch
    %30 = sbr.rel (0) target = $region33
  $region32: #{gmn_conv_forward.5} parent=0 // pred_region
    _
  $region33: #{gmn_conv_forward.5} parent=0 // pred_fallthru
    _
  // Predicated region
  $region34: #{gmn_conv_forward.5} parent=0 // pred_check
    _
  $region35: #{gmn_conv_forward.5} parent=0 // pred_check_branch
    %32 = sbr.rel (0) target = $region37
  $region36: #{gmn_conv_forward.5} parent=0 // pred_region
    _
  $region37: #{gmn_conv_forward.5} parent=0 // pred_fallthru
    _
  // Predicated region
  $region38: #{gmn_conv_forward.5} parent=0 // pred_check
    _
  $region39: #{gmn_conv_forward.5} parent=0 // pred_check_branch
    %34 = sbr.rel (0) target = $region41
  $region40: #{gmn_conv_forward.5} parent=0 // pred_region
    _
  $region41: #{gmn_conv_forward.5} parent=0 // pred_fallthru
    _
  %p36 = scmp.eq.s32.totalorder 0, 0
  // Predicated region
  $region42: #{gmn_conv_forward.5} parent=0 // pred_check
    %p37 = pneg %p36
  $region43: #{gmn_conv_forward.5} parent=0 // pred_check_branch
    %39 = sbr.rel (%p37) target = $region45
  $region44: #{gmn_conv_forward.5} parent=0 // pred_region
    %vm40 = vcmask 523264
    %41 = vst.msk [vmem:[#allocation2] sm:$0xff] %vm40, 0.0
    %42 = vst.msk [vmem:[#allocation2 + $0x8] sm:$0xff] %vm40, 0.0
    %43 = vst.msk [vmem:[#allocation2 + $0x10] sm:$0xff] %vm40, 0.0
  $region45: #{gmn_conv_forward.5} parent=0 // pred_fallthru
    _
  %v44 = vld [vmem:[%s0] sm:$0x1]
  %s45 = smul.u32 0, 24
  %v46 = vstv %s45
  %v47 = vsub.s32 %v44, %v46
  %v48 = vlaneseq
  %v49 = vshrl.u32 %v48, 7
  %v50 = vadd.s32 %v49, 8
  %v51 = vadd.s32 %v49, 16
  %v52 = vlaneseq
  %v53 = vshrl.u32 %v52, 7
  %v54 = vsub.s32 0, %v53
  %v55 = vrot.slane %v47, %v54
  %vm56 = vcmp.eq.s32.totalorder %v49, %v55
  %vm57 = vcmp.eq.s32.totalorder %v50, %v55
  %vm58 = vcmp.eq.s32.totalorder %v51, %v55
  %v59 = vsel %vm56, 1, 0
  %v60 = vsel %vm57, 1, 0
  %v61 = vsel %vm58, 1, 0
  %v62 = vcvt.s32.f32 %v59
  %v63 = vcvt.s32.f32 %v60
  %v64 = vcvt.s32.f32 %v61
  %v65 = vpack.c.bf16 %v63, %v62
  %v66 = vpack.c.bf16 %v64, %v64
  %v67 = vld [vmem:[#allocation2] sm:$0xff]
  %v68 = vld [vmem:[#allocation2 + $0x8] sm:$0xff]
  %v69 = vld [vmem:[#allocation2 + $0x10] sm:$0xff]
  %v70 = vld [vmem:[%s1] sm:$0xf]
  %v71 = vld [vmem:[%s1 + $0x4] sm:$0xf]
  %v72 = vld [vmem:[%s1 + $0x8] sm:$0xf]
  %v73 = vld [vmem:[%s1 + $0xc] sm:$0xf]
  %v74 = vld [vmem:[%s1 + $0x10] sm:$0xf]
  %v75 = vld [vmem:[%s1 + $0x14] sm:$0xf]
  %v82 = vunpack.c.l.b16 %v70
  %v83 = vunpack.c.l.b16 %v71
  %v84 = vunpack.c.l.b16 %v72
  %v85 = vunpack.c.l.b16 %v73
  %v86 = vunpack.c.l.b16 %v74
  %v87 = vunpack.c.l.b16 %v75
  %v88 = vpack.c.b16 %v83, %v82
  %v89 = vpack.c.b16 %v85, %v84
  %v90 = vpack.c.b16 %v87, %v86
  %vm94 = vcmask 392192
  %v96 = vsel %vm94, %v65, 0
  %v99 = vsel %vm94, %v66, 0
  %101 = vmatprep.subr.bf16.mxu0 0
  %102 = vmatpush1.bf16.msra.mxu0 0
  %103 = vmatprep.subr.bf16.mxu0 0
  %104 = vmatpush1.bf16.msra.mxu0 0
  %105 = vmatprep.subr.bf16.mxu0 0
  %106 = vmatpush1.bf16.msra.mxu0 0
  %107 = vmatprep.subr.bf16.mxu0 0
  %108 = vmatpush1.bf16.msra.mxu0 0
  %109 = vmatprep.subr.bf16.mxu0 0
  %110 = vmatpush1.bf16.msra.mxu0 0
  %111 = vmatprep.subr.bf16.mxu0 0
  %112 = vmatpush1.bf16.msra.mxu0 %v90
  %113 = vmatprep.subr.bf16.mxu0 0
  %114 = vmatpush1.bf16.msra.mxu0 %v89
  %115 = vmatprep.subr.bf16.mxu0 0
  %116 = vmatpush1.bf16.msra.mxu0 %v88
  %117 = vmatprep.subr.bf16.mxu0 0
  %118 = vmatpush2.bf16.msra.mxu0 0
  %119 = vmatprep.subr.bf16.mxu0 0
  %120 = vmatpush2.bf16.msra.mxu0 0
  %121 = vmatprep.subr.bf16.mxu0 0
  %122 = vmatpush2.bf16.msra.mxu0 0
  %123 = vmatprep.subr.bf16.mxu0 0
  %124 = vmatpush2.bf16.msra.mxu0 0
  %125 = vmatprep.subr.bf16.mxu0 0
  %126 = vmatpush2.bf16.msra.mxu0 0
  %127 = vmatprep.subr.bf16.mxu0 0
  %128 = vmatpush2.bf16.msra.mxu0 0
  %129 = vmatprep.subr.bf16.mxu0 0
  %130 = vmatpush2.bf16.msra.mxu0 0
  %131 = vmatprep.subr.bf16.mxu0 0
  %132 = vmatpush2.bf16.msra.mxu0 0
  %133 = vmatprep.mubr.bf16.mxu0 0
  %134 = vmatmul.mubr.bf16.gmra.mxu0 %v96
  %v135 = vpop.f32.mrf.mxu0
  %v136 = vadd.f32 0.0, %v135
  %v137 = vpop.f32.mrf.mxu0
  %v138 = vpop.f32.mrf.mxu0
  %v139 = vadd.f32 0.0, %v138
  %v140 = vpop.f32.mrf.mxu0
  %141 = vmatprep.mubr.bf16.mxu0 0
  %142 = vmatmul.mubr.bf16.gmra.mxu0 %v99
  %v143 = vpop.f32.mrf.mxu0
  %v144 = vadd.f32 0.0, %v143
  %v145 = vpop.f32.mrf.mxu0
  %v146 = vpop.f32.mrf.mxu0
  %v147 = vpop.f32.mrf.mxu0
  %148 = vdwg.mxu0
  %v149 = vadd.f32 %v67, %v136
  %v150 = vadd.f32 %v68, %v139
  %v151 = vadd.f32 %v69, %v144
  %vm152 = vcmask 523264
  %153 = vst.msk [vmem:[#allocation2] sm:$0xff] %vm152, %v149
  %154 = vst.msk [vmem:[#allocation2 + $0x8] sm:$0xff] %vm152, %v150
  %155 = vst.msk [vmem:[#allocation2 + $0x10] sm:$0xff] %vm152, %v151
  // Predicated region
  $region46: #{gmn_conv_forward.5} parent=0 // pred_check
    %p156 = pneg %p36
  $region47: #{gmn_conv_forward.5} parent=0 // pred_check_branch
    %158 = sbr.rel (%p156) target = $region49
  $region48: #{gmn_conv_forward.5} parent=0 // pred_region
    %v159 = vld [vmem:[#allocation2] sm:$0xff]
    %v160 = vld [vmem:[#allocation2 + $0x8] sm:$0xff]
    %v161 = vld [vmem:[#allocation2 + $0x10] sm:$0xff]
    %v162 = vpack.c.bf16 %v160, %v159
    %v163 = vpack.c.bf16 %v161, %v161
    %v164 = vld [vmem:[%s2] sm:$0xf]
    %v165 = vld [vmem:[%s2 + $0x4] sm:$0xf]
    %v166 = vld [vmem:[%s2 + $0x8] sm:$0xf]
    %v170 = vunpack.c.l.b16 %v164
    %v171 = vunpack.c.l.b16 %v165
    %v172 = vunpack.c.l.b16 %v166
    %v173 = vpack.c.b16 %v171, %v170
    %v174 = vpack.c.b16 %v172, %v172
    %175 = vrot.lane.b32.xlu0 %v173, 64
    %v176 = vpop.permute.xlu0 %175
    %177 = vrot.lane.b32.xlu0 %v174, 64
    %v178 = vpop.permute.xlu0 %177
    %v181 = vsel %vm152, %v162, %v176
    %v185 = vsel %vm152, %v163, %v178
    %v187 = vld [vmem:[%s4] sm:$0xf]
    %v188 = vld [vmem:[%s4 + $0x4] sm:$0xf]
    %v189 = vld [vmem:[%s4 + $0x8] sm:$0xf]
    %v190 = vld [vmem:[%s4 + $0xc] sm:$0xf]
    %v191 = vld [vmem:[%s4 + $0x10] sm:$0xf]
    %v192 = vld [vmem:[%s4 + $0x14] sm:$0xf]
    %v193 = vld [vmem:[%s4 + $0x18] sm:$0xf]
    %v194 = vld [vmem:[%s4 + $0x1c] sm:$0xf]
    %v195 = vld [vmem:[%s4 + $0x20] sm:$0xf]
    %v196 = vld [vmem:[%s4 + $0x24] sm:$0xf]
    %v197 = vld [vmem:[%s4 + $0x28] sm:$0xf]
    %v198 = vld [vmem:[%s4 + $0x2c] sm:$0xf]
    %v199 = vld [vmem:[%s4 + $0x30] sm:$0xf]
    %v200 = vld [vmem:[%s4 + $0x34] sm:$0xf]
    %v201 = vld [vmem:[%s4 + $0x38] sm:$0xf]
    %v202 = vld [vmem:[%s4 + $0x3c] sm:$0xf]
    %v203 = vld [vmem:[%s5] sm:$0x1]
    %v205 = vlaneseq
    %v206 = vshrl.u32 %v205, 7
    %v207 = vsub.s32 0, %v206
    %v208 = vrot.slane %v203, %v207
    %v226 = vunpack.c.l.b16 %v187
    %v227 = vunpack.c.l.b16 %v188
    %v228 = vunpack.c.l.b16 %v189
    %v229 = vunpack.c.l.b16 %v190
    %v230 = vunpack.c.l.b16 %v191
    %v231 = vunpack.c.l.b16 %v192
    %v232 = vunpack.c.l.b16 %v193
    %v233 = vunpack.c.l.b16 %v194
    %v234 = vunpack.c.l.b16 %v195
    %v235 = vunpack.c.l.b16 %v196
    %v236 = vunpack.c.l.b16 %v197
    %v237 = vunpack.c.l.b16 %v198
    %v238 = vunpack.c.l.b16 %v199
    %v239 = vunpack.c.l.b16 %v200
    %v240 = vunpack.c.l.b16 %v201
    %v241 = vunpack.c.l.b16 %v202
    %v242 = vpack.c.b16 %v227, %v226
    %v243 = vpack.c.b16 %v229, %v228
    %v244 = vpack.c.b16 %v231, %v230
    %v245 = vpack.c.b16 %v233, %v232
    %v246 = vpack.c.b16 %v235, %v234
    %v247 = vpack.c.b16 %v237, %v236
    %v248 = vpack.c.b16 %v239, %v238
    %v249 = vpack.c.b16 %v241, %v240
    %258 = vmatprep.subr.bf16.mxu0 0
    %259 = vmatpush1.bf16.msra.mxu0 %v249
    %260 = vmatprep.subr.bf16.mxu0 0
    %261 = vmatpush1.bf16.msra.mxu0 %v248
    %262 = vmatprep.subr.bf16.mxu0 0
    %263 = vmatpush1.bf16.msra.mxu0 %v247
    %264 = vmatprep.subr.bf16.mxu0 0
    %265 = vmatpush1.bf16.msra.mxu0 %v246
    %266 = vmatprep.subr.bf16.mxu0 0
    %267 = vmatpush1.bf16.msra.mxu0 %v245
    %268 = vmatprep.subr.bf16.mxu0 0
    %269 = vmatpush1.bf16.msra.mxu0 %v244
    %270 = vmatprep.subr.bf16.mxu0 0
    %271 = vmatpush1.bf16.msra.mxu0 %v243
    %272 = vmatprep.subr.bf16.mxu0 0
    %273 = vmatpush1.bf16.msra.mxu0 %v242
    %274 = vmatprep.subr.bf16.mxu0 0
    %275 = vmatpush2.bf16.msra.mxu0 0
    %276 = vmatprep.subr.bf16.mxu0 0
    %277 = vmatpush2.bf16.msra.mxu0 0
    %278 = vmatprep.subr.bf16.mxu0 0
    %279 = vmatpush2.bf16.msra.mxu0 0
    %280 = vmatprep.subr.bf16.mxu0 0
    %281 = vmatpush2.bf16.msra.mxu0 0
    %282 = vmatprep.subr.bf16.mxu0 0
    %283 = vmatpush2.bf16.msra.mxu0 0
    %284 = vmatprep.subr.bf16.mxu0 0
    %285 = vmatpush2.bf16.msra.mxu0 0
    %286 = vmatprep.subr.bf16.mxu0 0
    %287 = vmatpush2.bf16.msra.mxu0 0
    %288 = vmatprep.subr.bf16.mxu0 0
    %289 = vmatpush2.bf16.msra.mxu0 0
    %290 = vmatprep.mubr.bf16.mxu0 0
    %291 = vmatmul.mubr.bf16.gmra.mxu0 %v181
    %v292 = vpop.f32.mrf.mxu0
    %v293 = vadd.f32 %v208, %v292
    %v294 = vpop.f32.mrf.mxu0
    %v295 = vpop.f32.mrf.mxu0
    %v296 = vadd.f32 %v208, %v295
    %v297 = vpop.f32.mrf.mxu0
    %298 = vmatprep.mubr.bf16.mxu0 0
    %299 = vmatmul.mubr.bf16.gmra.mxu0 %v185
    %v300 = vpop.f32.mrf.mxu0
    %v301 = vadd.f32 %v208, %v300
    %v302 = vpop.f32.mrf.mxu0
    %v303 = vpop.f32.mrf.mxu0
    %v304 = vpop.f32.mrf.mxu0
    %305 = vdwg.mxu0
    %v306 = vmax.f32 %v293, 0.0
    %v307 = vmax.f32 %v296, 0.0
    %v308 = vmax.f32 %v301, 0.0
    %v309 = vpack.c.bf16 %v307, %v306
    %v310 = vpack.c.bf16 %v308, %v308
    %v311 = vld [vmem:[%s6] sm:$0xf]
    %v312 = vld [vmem:[%s6 + $0x4] sm:$0xf]
    %v313 = vld [vmem:[%s6 + $0x8] sm:$0xf]
    %v314 = vld [vmem:[%s6 + $0xc] sm:$0xf]
    %v315 = vld [vmem:[%s6 + $0x10] sm:$0xf]
    %v316 = vld [vmem:[%s6 + $0x14] sm:$0xf]
    %v317 = vld [vmem:[%s6 + $0x18] sm:$0xf]
    %v318 = vld [vmem:[%s6 + $0x1c] sm:$0xf]
    %v319 = vld [vmem:[%s7] sm:$0x1]
    %v321 = vlaneseq
    %v322 = vshrl.u32 %v321, 7
    %v323 = vsub.s32 0, %v322
    %v324 = vrot.slane %v319, %v323
    %v334 = vunpack.c.l.b16 %v311
    %v335 = vunpack.c.l.b16 %v312
    %v336 = vunpack.c.l.b16 %v313
    %v337 = vunpack.c.l.b16 %v314
    %v338 = vunpack.c.l.b16 %v315
    %v339 = vunpack.c.l.b16 %v316
    %v340 = vunpack.c.l.b16 %v317
    %v341 = vunpack.c.l.b16 %v318
    %v342 = vpack.c.b16 %v335, %v334
    %v343 = vpack.c.b16 %v337, %v336
    %v344 = vpack.c.b16 %v339, %v338
    %v345 = vpack.c.b16 %v341, %v340
    %v351 = vsel %vm152, %v309, 0
    %v354 = vsel %vm152, %v310, 0
    %356 = vmatprep.subr.bf16.mxu0 0
    %357 = vmatpush1.bf16.msra.mxu0 0
    %358 = vmatprep.subr.bf16.mxu0 0
    %359 = vmatpush1.bf16.msra.mxu0 0
    %360 = vmatprep.subr.bf16.mxu0 0
    %361 = vmatpush1.bf16.msra.mxu0 0
    %362 = vmatprep.subr.bf16.mxu0 0
    %363 = vmatpush1.bf16.msra.mxu0 0
    %364 = vmatprep.subr.bf16.mxu0 0
    %365 = vmatpush1.bf16.msra.mxu0 %v345
    %366 = vmatprep.subr.bf16.mxu0 0
    %367 = vmatpush1.bf16.msra.mxu0 %v344
    %368 = vmatprep.subr.bf16.mxu0 0
    %369 = vmatpush1.bf16.msra.mxu0 %v343
    %370 = vmatprep.subr.bf16.mxu0 0
    %371 = vmatpush1.bf16.msra.mxu0 %v342
    %372 = vmatprep.subr.bf16.mxu0 0
    %373 = vmatpush2.bf16.msra.mxu0 0
    %374 = vmatprep.subr.bf16.mxu0 0
    %375 = vmatpush2.bf16.msra.mxu0 0
    %376 = vmatprep.subr.bf16.mxu0 0
    %377 = vmatpush2.bf16.msra.mxu0 0
    %378 = vmatprep.subr.bf16.mxu0 0
    %379 = vmatpush2.bf16.msra.mxu0 0
    %380 = vmatprep.subr.bf16.mxu0 0
    %381 = vmatpush2.bf16.msra.mxu0 0
    %382 = vmatprep.subr.bf16.mxu0 0
    %383 = vmatpush2.bf16.msra.mxu0 0
    %384 = vmatprep.subr.bf16.mxu0 0
    %385 = vmatpush2.bf16.msra.mxu0 0
    %386 = vmatprep.subr.bf16.mxu0 0
    %387 = vmatpush2.bf16.msra.mxu0 0
    %388 = vmatprep.mubr.bf16.mxu0 0
    %389 = vmatmul.mubr.bf16.gmra.mxu0 %v351
    %v390 = vpop.f32.mrf.mxu0
    %v391 = vadd.f32 %v324, %v390
    %v392 = vpop.f32.mrf.mxu0
    %v393 = vpop.f32.mrf.mxu0
    %v394 = vadd.f32 %v324, %v393
    %v395 = vpop.f32.mrf.mxu0
    %396 = vmatprep.mubr.bf16.mxu0 0
    %397 = vmatmul.mubr.bf16.gmra.mxu0 %v354
    %v398 = vpop.f32.mrf.mxu0
    %v399 = vadd.f32 %v324, %v398
    %v400 = vpop.f32.mrf.mxu0
    %v401 = vpop.f32.mrf.mxu0
    %v402 = vpop.f32.mrf.mxu0
    %403 = vdwg.mxu0
    %v404 = vmax.f32 %v391, 0.0
    %v405 = vmax.f32 %v394, 0.0
    %v406 = vmax.f32 %v399, 0.0
    %v407 = vpack.c.bf16 %v405, %v404
    %v408 = vpack.c.bf16 %v406, %v406
    %v409 = vld [vmem:[%s8] sm:$0xf]
    %v410 = vld [vmem:[%s8 + $0x4] sm:$0xf]
    %v411 = vld [vmem:[%s8 + $0x8] sm:$0xf]
    %v412 = vld [vmem:[%s8 + $0xc] sm:$0xf]
    %v413 = vld [vmem:[%s9] sm:$0x1]
    %v415 = vlaneseq
    %v416 = vshrl.u32 %v415, 7
    %v417 = vsub.s32 0, %v416
    %v418 = vrot.slane %v413, %v417
    %v424 = vunpack.c.l.b16 %v409
    %v425 = vunpack.c.l.b16 %v410
    %v426 = vunpack.c.l.b16 %v411
    %v427 = vunpack.c.l.b16 %v412
    %v428 = vpack.c.b16 %v425, %v424
    %v429 = vpack.c.b16 %v427, %v426
    %vm432 = vcmask 261120
    %v434 = vsel %vm432, %v407, 0
    %v437 = vsel %vm432, %v408, 0
    %439 = vmatprep.subr.bf16.mxu0 0
    %440 = vmatpush1.bf16.msra.mxu0 0
    %441 = vmatprep.subr.bf16.mxu0 0
    %442 = vmatpush1.bf16.msra.mxu0 0
    %443 = vmatprep.subr.bf16.mxu0 0
    %444 = vmatpush1.bf16.msra.mxu0 0
    %445 = vmatprep.subr.bf16.mxu0 0
    %446 = vmatpush1.bf16.msra.mxu0 0
    %447 = vmatprep.subr.bf16.mxu0 0
    %448 = vmatpush1.bf16.msra.mxu0 0
    %449 = vmatprep.subr.bf16.mxu0 0
    %450 = vmatpush1.bf16.msra.mxu0 0
    %451 = vmatprep.subr.bf16.mxu0 0
    %452 = vmatpush1.bf16.msra.mxu0 %v429
    %453 = vmatprep.subr.bf16.mxu0 0
    %454 = vmatpush1.bf16.msra.mxu0 %v428
    %455 = vmatprep.subr.bf16.mxu0 0
    %456 = vmatpush2.bf16.msra.mxu0 0
    %457 = vmatprep.subr.bf16.mxu0 0
    %458 = vmatpush2.bf16.msra.mxu0 0
    %459 = vmatprep.subr.bf16.mxu0 0
    %460 = vmatpush2.bf16.msra.mxu0 0
    %461 = vmatprep.subr.bf16.mxu0 0
    %462 = vmatpush2.bf16.msra.mxu0 0
    %463 = vmatprep.subr.bf16.mxu0 0
    %464 = vmatpush2.bf16.msra.mxu0 0
    %465 = vmatprep.subr.bf16.mxu0 0
    %466 = vmatpush2.bf16.msra.mxu0 0
    %467 = vmatprep.subr.bf16.mxu0 0
    %468 = vmatpush2.bf16.msra.mxu0 0
    %469 = vmatprep.subr.bf16.mxu0 0
    %470 = vmatpush2.bf16.msra.mxu0 0
    %471 = vmatprep.mubr.bf16.mxu0 0
    %472 = vmatmul.mubr.bf16.gmra.mxu0 %v434
    %v473 = vpop.f32.mrf.mxu0
    %v474 = vadd.f32 %v418, %v473
    %v475 = vpop.f32.mrf.mxu0
    %v476 = vpop.f32.mrf.mxu0
    %v477 = vadd.f32 %v418, %v476
    %v478 = vpop.f32.mrf.mxu0
    %479 = vmatprep.mubr.bf16.mxu0 0
    %480 = vmatmul.mubr.bf16.gmra.mxu0 %v437
    %v481 = vpop.f32.mrf.mxu0
    %v482 = vadd.f32 %v418, %v481
    %v483 = vpop.f32.mrf.mxu0
    %v484 = vpop.f32.mrf.mxu0
    %v485 = vpop.f32.mrf.mxu0
    %486 = vdwg.mxu0
    %v487 = vld [vmem:[%s3] sm:$0xff]
    %v488 = vld [vmem:[%s3 + $0x8] sm:$0xff]
    %v489 = vld [vmem:[%s3 + $0x10] sm:$0xff]
    %v490 = vadd.f32 %v487, %v474
    %v491 = vadd.f32 %v488, %v477
    %v492 = vadd.f32 %v489, %v482
    %493 = vst.msk [vmem:[%s10] sm:$0xff] %vm432, %v490
    %494 = vst.msk [vmem:[%s10 + $0x8] sm:$0xff] %vm432, %v491
    %495 = vst.msk [vmem:[%s10 + $0x10] sm:$0xff] %vm432, %v492
  $region49: #{gmn_conv_forward.5} parent=0 // pred_fallthru
    _
  // Predicated region
  $region50: #{gmn_conv_forward.5} parent=0 // pred_check
    _
  $region51: #{gmn_conv_forward.5} parent=0 // pred_check_branch
    %497 = sbr.rel (0) target = $region53
  $region52: #{gmn_conv_forward.5} parent=0 // pred_region
    _
  $region53: #{gmn_conv_forward.5} parent=0 // pred_fallthru
    _
  // Predicated region
  $region54: #{gmn_conv_forward.5} parent=0 // pred_check
    _
  $region55: #{gmn_conv_forward.5} parent=0 // pred_check_branch
    %499 = sbr.rel (0) target = $region57
  $region56: #{gmn_conv_forward.5} parent=0 // pred_region
    _
  $region57: #{gmn_conv_forward.5} parent=0 // pred_fallthru
    _

</llo_original>
